<compile_context>
chip_gen: v7x
topology: tpu7x:2x2x1
jax: 0.10.0
libtpu: 0.0.40
codegen_flags: <defaults>
</compile_context>

<pallas_src>
import jax
import jax.numpy as jnp
from jax import lax
from jax.experimental import pallas as pl
from jax.experimental.pallas import tpu as pltpu


# ------------------------------ kernels -------------------------------------


def _embed_kernel_direct(ids_ref, table_ref, out_ref):
    """Small-n path: natural (n, D) output layout, VPU select-overwrite."""
    # ids_ref:   (tile_n, 1) int32
    # table_ref: (vocab, D)  float32  (whole table, ~2 vregs, resident)
    # out_ref:   (tile_n, D) float32
    ids = ids_ref[...]                         # (tile_n, 1)
    table = table_ref[...]                     # (vocab, D)
    vocab, emb_dim = table.shape
    tile_n = ids.shape[0]

    acc = jnp.zeros((tile_n, emb_dim), jnp.float32)
    # Tiny static vocab -> unrolled.  Each ID matches exactly one entry, so a
    # select-overwrite is semantically identical to select-accumulate (OOB IDs
    # keep the zero init) and costs half the VALU work.
    for v in range(vocab):
        acc = jnp.where(ids == v, table[v:v + 1, :], acc)
    out_ref[...] = acc


def _embed_kernel_mxu(ids_ref, table_t_ref, out_ref):
    """Large-n path: lane-dense transposed output via a one-hot MXU matmul."""
    # ids_ref:     (1, tile_n)  int32   lane-major IDs (128 per vreg row)
    # table_t_ref: (D, vocab)   float32 transposed table (resident)
    # out_ref:     (D, tile_n)  float32 transposed, lane-dense output
    ids = ids_ref[...]                         # (1, tile_n)
    table_t = table_t_ref[...]                 # (D, vocab)
    emb_dim, vocab = table_t.shape
    tile_n = ids.shape[1]

    iota = lax.broadcasted_iota(jnp.int32, (vocab, tile_n), 0)
    one_hot = (iota == ids).astype(jnp.float32)            # (vocab, tile_n)
    # HIGHEST precision -> multi-pass f32 matmul, reproduces the exact f32
    # table values (one_hot is exactly 0/1), so this is a true gather.
    out_ref[...] = jnp.dot(
        table_t, one_hot,
        preferred_element_type=jnp.float32,
        precision=lax.Precision.HIGHEST,
    )


# ------------------------------ wrapper --------------------------------------

_SMALL_N_THRESHOLD = 2048   # below this, layout plumbing costs more than it saves
_MAX_TILE_N = 16384         # 32*16384*4B = 2 MiB out tile; x2 buffers << scoped VMEM


def _piece_embedder_impl(x_ids, table):
    """Embedding lookup: returns table[x_ids] with shape x_ids.shape + (D,)."""
    orig_shape = x_ids.shape
    vocab, emb_dim = table.shape
    n = x_ids.size

    ids_flat = x_ids.reshape(-1).astype(jnp.int32)
    table = table.astype(jnp.float32)

    if n <= _SMALL_N_THRESHOLD:
        # -------- small-n path: direct (n, D) output, single grid step ------
        n_pad = max(8, ((n + 7) // 8) * 8)
        if n_pad != n:
            ids_flat = jnp.pad(ids_flat, (0, n_pad - n))   # pad with valid ID 0
        ids2d = ids_flat.reshape(n_pad, 1)

        out = pl.pallas_call(
            _embed_kernel_direct,
            out_shape=jax.ShapeDtypeStruct((n_pad, emb_dim), jnp.float32),
            grid_spec=pltpu.PrefetchScalarGridSpec(
                num_scalar_prefetch=0,
                grid=(1,),
                in_specs=[
                    pl.BlockSpec((n_pad, 1), lambda i: (0, 0)),
                    pl.BlockSpec((vocab, emb_dim), lambda i: (0, 0)),
                ],
                out_specs=pl.BlockSpec((n_pad, emb_dim), lambda i: (0, 0)),
            ),
        )(ids2d, table)
        return out[:n].reshape(*orig_shape, emb_dim)

    # -------- large-n path: transposed lane-dense output, one-hot MXU -------
    n_lane = ((n + 127) // 128) * 128
    tile_n = min(_MAX_TILE_N, n_lane)
    n_pad = ((n + tile_n - 1) // tile_n) * tile_n
    grid = n_pad // tile_n

    if n_pad != n:
        ids_flat = jnp.pad(ids_flat, (0, n_pad - n))       # pad with valid ID 0
    ids2d = ids_flat.reshape(1, n_pad)                      # lane-major IDs
    table_t = table.T                                       # (D, vocab); fused under jit

    out_t = pl.pallas_call(
        _embed_kernel_mxu,
        out_shape=jax.ShapeDtypeStruct((emb_dim, n_pad), jnp.float32),
        grid_spec=pltpu.PrefetchScalarGridSpec(
            num_scalar_prefetch=0,
            grid=(grid,),
            in_specs=[
                # IDs tile: dim0 == full array dim, dim1 % 128 == 0
                pl.BlockSpec((1, tile_n), lambda i: (0, i)),
                # Full transposed table, constant block index -> DMA'd once
                pl.BlockSpec((emb_dim, vocab), lambda i: (0, 0)),
            ],
            out_specs=pl.BlockSpec((emb_dim, tile_n), lambda i: (0, i)),
        ),
        compiler_params=pltpu.CompilerParams(
            dimension_semantics=("parallel",)),
    )(ids2d, table_t)

    # Transpose back to the (..., D) layout expected by the consumer.
    return out_t[:, :n].T.reshape(*orig_shape, emb_dim)


# JIT the whole wrapper so the padding/reshape/transpose plumbing fuses around
# the pallas_call (shapes are static, so the path choice is resolved at trace).
piece_embedder = jax.jit(_piece_embedder_impl)


if __name__ == "__main__":
    # Chess-flavoured shapes: 13 piece types (12 pieces + empty), embedding_dim=32.
    vocab_size = 13
    embedding_dim = 32

    key = jax.random.PRNGKey(0)
    k_tab, k_ids_s, k_ids_l = jax.random.split(key, 3)

    # nn.Embedding default init: N(0, 1), float32 — deterministic synthetic params.
    table = jax.random.normal(k_tab, (vocab_size, embedding_dim), dtype=jnp.float32)

    # Small path: batch of 2 boards of 8x8 squares (128 IDs).
    x_small = jax.random.randint(k_ids_s, (2, 8, 8), 0, vocab_size, dtype=jnp.int32)
    out_small = jax.block_until_ready(piece_embedder(x_small, table))
    ref_small = table[x_small]
    assert out_small.shape == (2, 8, 8, embedding_dim)
    assert out_small.dtype == jnp.float32
    assert jnp.allclose(out_small, ref_small, atol=1e-6), "small-path mismatch"

    # Large path (exercises the one-hot MXU kernel): 64 boards -> 4096 IDs.
    x_large = jax.random.randint(k_ids_l, (64, 8, 8), 0, vocab_size, dtype=jnp.int32)
    out_large = jax.block_until_ready(piece_embedder(x_large, table))
    ref_large = table[x_large]
    assert out_large.shape == (64, 8, 8, embedding_dim)
    assert jnp.allclose(out_large, ref_large, atol=1e-6), "large-path mismatch"

    print("KERNEL_OK")
</pallas_src>

<mosaic_0001>
module attributes {stable_mosaic.version = 11 : i64} {
  func.func @_embed_kernel_direct(%arg0: i32, %arg1: memref<128x1xi32, #tpu.memory_space<vmem>>, %arg2: memref<13x32xf32, #tpu.memory_space<vmem>>, %arg3: memref<128x32xf32, #tpu.memory_space<vmem>>) attributes {dimension_semantics = [#tpu.dimension_semantics<arbitrary>], iteration_bounds = array<i64: 1>, scalar_prefetch = 0 : i64, scratch_operands = 0 : i64, tpu.core_type = #tpu.core_type<tc>, window_params = [{pipeline_mode = #tpu.pipeline_mode<synchronous>, transform_indices = @transform_0, window_bounds = array<i64: 128, 1>}, {pipeline_mode = #tpu.pipeline_mode<synchronous>, transform_indices = @transform_1, window_bounds = array<i64: 13, 32>}, {pipeline_mode = #tpu.pipeline_mode<synchronous>, transform_indices = @transform_2, window_bounds = array<i64: 128, 32>}]} {
    %c0 = arith.constant 0 : index
    %c0_0 = arith.constant 0 : index
    %0 = vector.load %arg1[%c0, %c0_0] : memref<128x1xi32, #tpu.memory_space<vmem>>, vector<128x1xi32>
    %c0_1 = arith.constant 0 : index
    %c0_2 = arith.constant 0 : index
    %1 = vector.load %arg2[%c0_1, %c0_2] : memref<13x32xf32, #tpu.memory_space<vmem>>, vector<13x32xf32>
    %cst = arith.constant 0.000000e+00 : f32
    %2 = vector.broadcast %cst : f32 to vector<128x32xf32>
    %c0_i32 = arith.constant 0 : i32
    %3 = vector.broadcast %c0_i32 : i32 to vector<128x1xi32>
    %4 = arith.cmpi eq, %0, %3 : vector<128x1xi32>
    %5 = vector.extract_strided_slice %1 {offsets = [0, 0], sizes = [1, 32], strides = [1, 1]} : vector<13x32xf32> to vector<1x32xf32>
    %6 = vector.shape_cast %4 : vector<128x1xi1> to vector<128x1xi1>
    %7 = vector.broadcast %6 : vector<128x1xi1> to vector<128x32xi1>
    %8 = vector.shape_cast %5 : vector<1x32xf32> to vector<1x32xf32>
    %9 = vector.broadcast %8 : vector<1x32xf32> to vector<128x32xf32>
    %10 = arith.select %7, %9, %2 : vector<128x32xi1>, vector<128x32xf32>
    %c1_i32 = arith.constant 1 : i32
    %11 = vector.broadcast %c1_i32 : i32 to vector<128x1xi32>
    %12 = arith.cmpi eq, %0, %11 : vector<128x1xi32>
    %13 = vector.extract_strided_slice %1 {offsets = [1, 0], sizes = [1, 32], strides = [1, 1]} : vector<13x32xf32> to vector<1x32xf32>
    %14 = vector.shape_cast %12 : vector<128x1xi1> to vector<128x1xi1>
    %15 = vector.broadcast %14 : vector<128x1xi1> to vector<128x32xi1>
    %16 = vector.shape_cast %13 : vector<1x32xf32> to vector<1x32xf32>
    %17 = vector.broadcast %16 : vector<1x32xf32> to vector<128x32xf32>
    %18 = arith.select %15, %17, %10 : vector<128x32xi1>, vector<128x32xf32>
    %c2_i32 = arith.constant 2 : i32
    %19 = vector.broadcast %c2_i32 : i32 to vector<128x1xi32>
    %20 = arith.cmpi eq, %0, %19 : vector<128x1xi32>
    %21 = vector.extract_strided_slice %1 {offsets = [2, 0], sizes = [1, 32], strides = [1, 1]} : vector<13x32xf32> to vector<1x32xf32>
    %22 = vector.shape_cast %20 : vector<128x1xi1> to vector<128x1xi1>
    %23 = vector.broadcast %22 : vector<128x1xi1> to vector<128x32xi1>
    %24 = vector.shape_cast %21 : vector<1x32xf32> to vector<1x32xf32>
    %25 = vector.broadcast %24 : vector<1x32xf32> to vector<128x32xf32>
    %26 = arith.select %23, %25, %18 : vector<128x32xi1>, vector<128x32xf32>
    %c3_i32 = arith.constant 3 : i32
    %27 = vector.broadcast %c3_i32 : i32 to vector<128x1xi32>
    %28 = arith.cmpi eq, %0, %27 : vector<128x1xi32>
    %29 = vector.extract_strided_slice %1 {offsets = [3, 0], sizes = [1, 32], strides = [1, 1]} : vector<13x32xf32> to vector<1x32xf32>
    %30 = vector.shape_cast %28 : vector<128x1xi1> to vector<128x1xi1>
    %31 = vector.broadcast %30 : vector<128x1xi1> to vector<128x32xi1>
    %32 = vector.shape_cast %29 : vector<1x32xf32> to vector<1x32xf32>
    %33 = vector.broadcast %32 : vector<1x32xf32> to vector<128x32xf32>
    %34 = arith.select %31, %33, %26 : vector<128x32xi1>, vector<128x32xf32>
    %c4_i32 = arith.constant 4 : i32
    %35 = vector.broadcast %c4_i32 : i32 to vector<128x1xi32>
    %36 = arith.cmpi eq, %0, %35 : vector<128x1xi32>
    %37 = vector.extract_strided_slice %1 {offsets = [4, 0], sizes = [1, 32], strides = [1, 1]} : vector<13x32xf32> to vector<1x32xf32>
    %38 = vector.shape_cast %36 : vector<128x1xi1> to vector<128x1xi1>
    %39 = vector.broadcast %38 : vector<128x1xi1> to vector<128x32xi1>
    %40 = vector.shape_cast %37 : vector<1x32xf32> to vector<1x32xf32>
    %41 = vector.broadcast %40 : vector<1x32xf32> to vector<128x32xf32>
    %42 = arith.select %39, %41, %34 : vector<128x32xi1>, vector<128x32xf32>
    %c5_i32 = arith.constant 5 : i32
    %43 = vector.broadcast %c5_i32 : i32 to vector<128x1xi32>
    %44 = arith.cmpi eq, %0, %43 : vector<128x1xi32>
    %45 = vector.extract_strided_slice %1 {offsets = [5, 0], sizes = [1, 32], strides = [1, 1]} : vector<13x32xf32> to vector<1x32xf32>
    %46 = vector.shape_cast %44 : vector<128x1xi1> to vector<128x1xi1>
    %47 = vector.broadcast %46 : vector<128x1xi1> to vector<128x32xi1>
    %48 = vector.shape_cast %45 : vector<1x32xf32> to vector<1x32xf32>
    %49 = vector.broadcast %48 : vector<1x32xf32> to vector<128x32xf32>
    %50 = arith.select %47, %49, %42 : vector<128x32xi1>, vector<128x32xf32>
    %c6_i32 = arith.constant 6 : i32
    %51 = vector.broadcast %c6_i32 : i32 to vector<128x1xi32>
    %52 = arith.cmpi eq, %0, %51 : vector<128x1xi32>
    %53 = vector.extract_strided_slice %1 {offsets = [6, 0], sizes = [1, 32], strides = [1, 1]} : vector<13x32xf32> to vector<1x32xf32>
    %54 = vector.shape_cast %52 : vector<128x1xi1> to vector<128x1xi1>
    %55 = vector.broadcast %54 : vector<128x1xi1> to vector<128x32xi1>
    %56 = vector.shape_cast %53 : vector<1x32xf32> to vector<1x32xf32>
    %57 = vector.broadcast %56 : vector<1x32xf32> to vector<128x32xf32>
    %58 = arith.select %55, %57, %50 : vector<128x32xi1>, vector<128x32xf32>
    %c7_i32 = arith.constant 7 : i32
    %59 = vector.broadcast %c7_i32 : i32 to vector<128x1xi32>
    %60 = arith.cmpi eq, %0, %59 : vector<128x1xi32>
    %61 = vector.extract_strided_slice %1 {offsets = [7, 0], sizes = [1, 32], strides = [1, 1]} : vector<13x32xf32> to vector<1x32xf32>
    %62 = vector.shape_cast %60 : vector<128x1xi1> to vector<128x1xi1>
    %63 = vector.broadcast %62 : vector<128x1xi1> to vector<128x32xi1>
    %64 = vector.shape_cast %61 : vector<1x32xf32> to vector<1x32xf32>
    %65 = vector.broadcast %64 : vector<1x32xf32> to vector<128x32xf32>
    %66 = arith.select %63, %65, %58 : vector<128x32xi1>, vector<128x32xf32>
    %c8_i32 = arith.constant 8 : i32
    %67 = vector.broadcast %c8_i32 : i32 to vector<128x1xi32>
    %68 = arith.cmpi eq, %0, %67 : vector<128x1xi32>
    %69 = vector.extract_strided_slice %1 {offsets = [8, 0], sizes = [1, 32], strides = [1, 1]} : vector<13x32xf32> to vector<1x32xf32>
    %70 = vector.shape_cast %68 : vector<128x1xi1> to vector<128x1xi1>
    %71 = vector.broadcast %70 : vector<128x1xi1> to vector<128x32xi1>
    %72 = vector.shape_cast %69 : vector<1x32xf32> to vector<1x32xf32>
    %73 = vector.broadcast %72 : vector<1x32xf32> to vector<128x32xf32>
    %74 = arith.select %71, %73, %66 : vector<128x32xi1>, vector<128x32xf32>
    %c9_i32 = arith.constant 9 : i32
    %75 = vector.broadcast %c9_i32 : i32 to vector<128x1xi32>
    %76 = arith.cmpi eq, %0, %75 : vector<128x1xi32>
    %77 = vector.extract_strided_slice %1 {offsets = [9, 0], sizes = [1, 32], strides = [1, 1]} : vector<13x32xf32> to vector<1x32xf32>
    %78 = vector.shape_cast %76 : vector<128x1xi1> to vector<128x1xi1>
    %79 = vector.broadcast %78 : vector<128x1xi1> to vector<128x32xi1>
    %80 = vector.shape_cast %77 : vector<1x32xf32> to vector<1x32xf32>
    %81 = vector.broadcast %80 : vector<1x32xf32> to vector<128x32xf32>
    %82 = arith.select %79, %81, %74 : vector<128x32xi1>, vector<128x32xf32>
    %c10_i32 = arith.constant 10 : i32
    %83 = vector.broadcast %c10_i32 : i32 to vector<128x1xi32>
    %84 = arith.cmpi eq, %0, %83 : vector<128x1xi32>
    %85 = vector.extract_strided_slice %1 {offsets = [10, 0], sizes = [1, 32], strides = [1, 1]} : vector<13x32xf32> to vector<1x32xf32>
    %86 = vector.shape_cast %84 : vector<128x1xi1> to vector<128x1xi1>
    %87 = vector.broadcast %86 : vector<128x1xi1> to vector<128x32xi1>
    %88 = vector.shape_cast %85 : vector<1x32xf32> to vector<1x32xf32>
    %89 = vector.broadcast %88 : vector<1x32xf32> to vector<128x32xf32>
    %90 = arith.select %87, %89, %82 : vector<128x32xi1>, vector<128x32xf32>
    %c11_i32 = arith.constant 11 : i32
    %91 = vector.broadcast %c11_i32 : i32 to vector<128x1xi32>
    %92 = arith.cmpi eq, %0, %91 : vector<128x1xi32>
    %93 = vector.extract_strided_slice %1 {offsets = [11, 0], sizes = [1, 32], strides = [1, 1]} : vector<13x32xf32> to vector<1x32xf32>
    %94 = vector.shape_cast %92 : vector<128x1xi1> to vector<128x1xi1>
    %95 = vector.broadcast %94 : vector<128x1xi1> to vector<128x32xi1>
    %96 = vector.shape_cast %93 : vector<1x32xf32> to vector<1x32xf32>
    %97 = vector.broadcast %96 : vector<1x32xf32> to vector<128x32xf32>
    %98 = arith.select %95, %97, %90 : vector<128x32xi1>, vector<128x32xf32>
    %c12_i32 = arith.constant 12 : i32
    %99 = vector.broadcast %c12_i32 : i32 to vector<128x1xi32>
    %100 = arith.cmpi eq, %0, %99 : vector<128x1xi32>
    %101 = vector.extract_strided_slice %1 {offsets = [12, 0], sizes = [1, 32], strides = [1, 1]} : vector<13x32xf32> to vector<1x32xf32>
    %102 = vector.shape_cast %100 : vector<128x1xi1> to vector<128x1xi1>
    %103 = vector.broadcast %102 : vector<128x1xi1> to vector<128x32xi1>
    %104 = vector.shape_cast %101 : vector<1x32xf32> to vector<1x32xf32>
    %105 = vector.broadcast %104 : vector<1x32xf32> to vector<128x32xf32>
    %106 = arith.select %103, %105, %98 : vector<128x32xi1>, vector<128x32xf32>
    %c0_3 = arith.constant 0 : index
    %c0_4 = arith.constant 0 : index
    %107 = vector.load %arg3[%c0_3, %c0_4] : memref<128x32xf32, #tpu.memory_space<vmem>>, vector<128x32xf32>
    tpu.vector_store %arg3[%c0_3, %c0_4], %106 {strides = array<i32>} : memref<128x32xf32, #tpu.memory_space<vmem>>, vector<128x32xf32>,
    return
  }
  func.func @transform_0(%arg0: i32) -> (i32, i32) {
    %c0_i32 = arith.constant 0 : i32
    %c0_i32_0 = arith.constant 0 : i32
    %c0_i32_1 = arith.constant 0 : i32
    return %c0_i32, %c0_i32_0 : i32, i32
  }
  func.func @transform_1(%arg0: i32) -> (i32, i32) {
    %c0_i32 = arith.constant 0 : i32
    %c0_i32_0 = arith.constant 0 : i32
    %c0_i32_1 = arith.constant 0 : i32
    return %c0_i32, %c0_i32_0 : i32, i32
  }
  func.func @transform_2(%arg0: i32) -> (i32, i32) {
    %c0_i32 = arith.constant 0 : i32
    %c0_i32_0 = arith.constant 0 : i32
    %c0_i32_1 = arith.constant 0 : i32
    return %c0_i32, %c0_i32_0 : i32, i32
  }
}

</mosaic_0001>

<llo_original>
// kernel: _piece_embedder_impl.1
$region0: #{_piece_embedder_impl.1}
  #allocation0 [shape = 'u32[]', space=smem, size = 0x4, offset = 0x4, fixed_abs, tag = 'smem constant byte address 0x4 - core index']
  #allocation1 [shape = 'u32[144,128]{1,0:T(1,128)}', space=vmem, size = 0x12000, scoped, tag = 'internal scratch']
  %s0 = inlined_call_operand.vmem [shape: s32[128,1], index: 0, kind: input, shape index: {}]
  %s1 = inlined_call_operand.vmem [shape: f32[13,32], index: 1, kind: input, shape index: {}]
  %s2 = inlined_call_operand.hbm [shape: f32[128,32], index: 2, kind: output, shape index: {}]
  %s3 = sld [smem:[#allocation0]]
  $region18: #{_piece_embedder_impl.1} parent=0
    _
  %s5 = ssub.s32 1, %s3
  %s6 = scalar_select 0, %s5, %s3
  $region1: #{_piece_embedder_impl.1} parent=0
    #allocation2 [shape = 'u8[65536]{0}', space=vmem, size = 0x10000, scoped, tag = 'output window, operand 0, single buffered']
    #allocation3 [shape = 's32[1]{0}', space=sflag, size = 0x4, scoped, tag = 'scoped memory for _piece_embedder_impl.1']
    %7 = vsyncpa [#allocation3], 0
    // Predicated region
    $region2: #{_piece_embedder_impl.1} parent=1 // pred_check
      _
    $region3: #{_piece_embedder_impl.1} parent=1 // pred_check_branch
      %9 = sbr.rel (0) target = $region5
    $region4: #{_piece_embedder_impl.1} parent=1 // pred_region
      _
    $region5: #{_piece_embedder_impl.1} parent=1 // pred_fallthru
      _
    // Predicated region
    $region6: #{_piece_embedder_impl.1} parent=1 // pred_check
      _
    $region7: #{_piece_embedder_impl.1} parent=1 // pred_check_branch
      %11 = sbr.rel (0) target = $region9
    $region8: #{_piece_embedder_impl.1} parent=1 // pred_region
      _
    $region9: #{_piece_embedder_impl.1} parent=1 // pred_fallthru
      _
    %v12 = vld [vmem:[%s0] sm:$0xff]
    %v13 = vld [vmem:[%s0 + $0x8] sm:$0xff]
    %v14 = vld [vmem:[%s0 + $0x10] sm:$0xff]
    %v15 = vld [vmem:[%s0 + $0x18] sm:$0xff]
    %v16 = vld [vmem:[%s0 + $0x20] sm:$0xff]
    %v17 = vld [vmem:[%s0 + $0x28] sm:$0xff]
    %v18 = vld [vmem:[%s0 + $0x30] sm:$0xff]
    %v19 = vld [vmem:[%s0 + $0x38] sm:$0xff]
    %v20 = vld [vmem:[%s0 + $0x40] sm:$0xff]
    %v21 = vld [vmem:[%s0 + $0x48] sm:$0xff]
    %v22 = vld [vmem:[%s0 + $0x50] sm:$0xff]
    %v23 = vld [vmem:[%s0 + $0x58] sm:$0xff]
    %v24 = vld [vmem:[%s0 + $0x60] sm:$0xff]
    %v25 = vld [vmem:[%s0 + $0x68] sm:$0xff]
    %v26 = vld [vmem:[%s0 + $0x70] sm:$0xff]
    %v27 = vld [vmem:[%s0 + $0x78] sm:$0xff]
    %v28 = vld [vmem:[%s1] sm:$0xff]
    %v29 = vld [vmem:[%s1 + $0x8] sm:$0x1f]
    %vm30 = vcmp.eq.s32.totalorder %v12, 0
    %vm31 = vcmp.eq.s32.totalorder %v13, 0
    %vm32 = vcmp.eq.s32.totalorder %v14, 0
    %vm33 = vcmp.eq.s32.totalorder %v15, 0
    %vm34 = vcmp.eq.s32.totalorder %v16, 0
    %vm35 = vcmp.eq.s32.totalorder %v17, 0
    %vm36 = vcmp.eq.s32.totalorder %v18, 0
    %vm37 = vcmp.eq.s32.totalorder %v19, 0
    %vm38 = vcmp.eq.s32.totalorder %v20, 0
    %vm39 = vcmp.eq.s32.totalorder %v21, 0
    %vm40 = vcmp.eq.s32.totalorder %v22, 0
    %vm41 = vcmp.eq.s32.totalorder %v23, 0
    %vm42 = vcmp.eq.s32.totalorder %v24, 0
    %vm43 = vcmp.eq.s32.totalorder %v25, 0
    %vm44 = vcmp.eq.s32.totalorder %v26, 0
    %vm45 = vcmp.eq.s32.totalorder %v27, 0
    %v46 = vsel %vm30, 1, 0
    %v47 = vsel %vm31, 1, 0
    %v48 = vsel %vm32, 1, 0
    %v49 = vsel %vm33, 1, 0
    %v50 = vsel %vm34, 1, 0
    %v51 = vsel %vm35, 1, 0
    %v52 = vsel %vm36, 1, 0
    %v53 = vsel %vm37, 1, 0
    %v54 = vsel %vm38, 1, 0
    %v55 = vsel %vm39, 1, 0
    %v56 = vsel %vm40, 1, 0
    %v57 = vsel %vm41, 1, 0
    %v58 = vsel %vm42, 1, 0
    %v59 = vsel %vm43, 1, 0
    %v60 = vsel %vm44, 1, 0
    %v61 = vsel %vm45, 1, 0
    %62 = vset.pattern.permute.xlu0 0
    %63 = vperm.xlu0 %62, %v46
    %v64 = vpop.permute.xlu0 %63
    %65 = vset.pattern.permute.xlu0 0
    %66 = vperm.xlu0 %65, %v47
    %v67 = vpop.permute.xlu0 %66
    %68 = vset.pattern.permute.xlu0 0
    %69 = vperm.xlu0 %68, %v48
    %v70 = vpop.permute.xlu0 %69
    %71 = vset.pattern.permute.xlu0 0
    %72 = vperm.xlu0 %71, %v49
    %v73 = vpop.permute.xlu0 %72
    %74 = vset.pattern.permute.xlu0 0
    %75 = vperm.xlu0 %74, %v50
    %v76 = vpop.permute.xlu0 %75
    %77 = vset.pattern.permute.xlu0 0
    %78 = vperm.xlu0 %77, %v51
    %v79 = vpop.permute.xlu0 %78
    %80 = vset.pattern.permute.xlu0 0
    %81 = vperm.xlu0 %80, %v52
    %v82 = vpop.permute.xlu0 %81
    %83 = vset.pattern.permute.xlu0 0
    %84 = vperm.xlu0 %83, %v53
    %v85 = vpop.permute.xlu0 %84
    %86 = vset.pattern.permute.xlu0 0
    %87 = vperm.xlu0 %86, %v54
    %v88 = vpop.permute.xlu0 %87
    %89 = vset.pattern.permute.xlu0 0
    %90 = vperm.xlu0 %89, %v55
    %v91 = vpop.permute.xlu0 %90
    %92 = vset.pattern.permute.xlu0 0
    %93 = vperm.xlu0 %92, %v56
    %v94 = vpop.permute.xlu0 %93
    %95 = vset.pattern.permute.xlu0 0
    %96 = vperm.xlu0 %95, %v57
    %v97 = vpop.permute.xlu0 %96
    %98 = vset.pattern.permute.xlu0 0
    %99 = vperm.xlu0 %98, %v58
    %v100 = vpop.permute.xlu0 %99
    %101 = vset.pattern.permute.xlu0 0
    %102 = vperm.xlu0 %101, %v59
    %v103 = vpop.permute.xlu0 %102
    %104 = vset.pattern.permute.xlu0 0
    %105 = vperm.xlu0 %104, %v60
    %v106 = vpop.permute.xlu0 %105
    %107 = vset.pattern.permute.xlu0 0
    %108 = vperm.xlu0 %107, %v61
    %v109 = vpop.permute.xlu0 %108
    %vm110 = vcmp.eq.s32.totalorder %v64, 1
    %vm111 = vcmp.eq.s32.totalorder %v67, 1
    %vm112 = vcmp.eq.s32.totalorder %v70, 1
    %vm113 = vcmp.eq.s32.totalorder %v73, 1
    %vm114 = vcmp.eq.s32.totalorder %v76, 1
    %vm115 = vcmp.eq.s32.totalorder %v79, 1
    %vm116 = vcmp.eq.s32.totalorder %v82, 1
    %vm117 = vcmp.eq.s32.totalorder %v85, 1
    %vm118 = vcmp.eq.s32.totalorder %v88, 1
    %vm119 = vcmp.eq.s32.totalorder %v91, 1
    %vm120 = vcmp.eq.s32.totalorder %v94, 1
    %vm121 = vcmp.eq.s32.totalorder %v97, 1
    %vm122 = vcmp.eq.s32.totalorder %v100, 1
    %vm123 = vcmp.eq.s32.totalorder %v103, 1
    %vm124 = vcmp.eq.s32.totalorder %v106, 1
    %vm125 = vcmp.eq.s32.totalorder %v109, 1
    %v126 = vlaneseq
    %v127 = vshrl.u32 %v126, 7
    %v128 = vsub.s32 0, %v127
    %v129 = vrot.slane %v28, %v128
    %v130 = vsel %vm110, %v129, 0.0
    %v131 = vsel %vm111, %v129, 0.0
    %v132 = vsel %vm112, %v129, 0.0
    %v133 = vsel %vm113, %v129, 0.0
    %v134 = vsel %vm114, %v129, 0.0
    %v135 = vsel %vm115, %v129, 0.0
    %v136 = vsel %vm116, %v129, 0.0
    %v137 = vsel %vm117, %v129, 0.0
    %v138 = vsel %vm118, %v129, 0.0
    %v139 = vsel %vm119, %v129, 0.0
    %v140 = vsel %vm120, %v129, 0.0
    %v141 = vsel %vm121, %v129, 0.0
    %v142 = vsel %vm122, %v129, 0.0
    %v143 = vsel %vm123, %v129, 0.0
    %v144 = vsel %vm124, %v129, 0.0
    %v145 = vsel %vm125, %v129, 0.0
    %vm146 = vcmp.eq.s32.totalorder %v12, 1
    %vm147 = vcmp.eq.s32.totalorder %v13, 1
    %vm148 = vcmp.eq.s32.totalorder %v14, 1
    %vm149 = vcmp.eq.s32.totalorder %v15, 1
    %vm150 = vcmp.eq.s32.totalorder %v16, 1
    %vm151 = vcmp.eq.s32.totalorder %v17, 1
    %vm152 = vcmp.eq.s32.totalorder %v18, 1
    %vm153 = vcmp.eq.s32.totalorder %v19, 1
    %vm154 = vcmp.eq.s32.totalorder %v20, 1
    %vm155 = vcmp.eq.s32.totalorder %v21, 1
    %vm156 = vcmp.eq.s32.totalorder %v22, 1
    %vm157 = vcmp.eq.s32.totalorder %v23, 1
    %vm158 = vcmp.eq.s32.totalorder %v24, 1
    %vm159 = vcmp.eq.s32.totalorder %v25, 1
    %vm160 = vcmp.eq.s32.totalorder %v26, 1
    %vm161 = vcmp.eq.s32.totalorder %v27, 1
    %v162 = vsel %vm146, 1, 0
    %v163 = vsel %vm147, 1, 0
    %v164 = vsel %vm148, 1, 0
    %v165 = vsel %vm149, 1, 0
    %v166 = vsel %vm150, 1, 0
    %v167 = vsel %vm151, 1, 0
    %v168 = vsel %vm152, 1, 0
    %v169 = vsel %vm153, 1, 0
    %v170 = vsel %vm154, 1, 0
    %v171 = vsel %vm155, 1, 0
    %v172 = vsel %vm156, 1, 0
    %v173 = vsel %vm157, 1, 0
    %v174 = vsel %vm158, 1, 0
    %v175 = vsel %vm159, 1, 0
    %v176 = vsel %vm160, 1, 0
    %v177 = vsel %vm161, 1, 0
    %178 = vset.pattern.permute.xlu0 0
    %179 = vperm.xlu0 %178, %v162
    %v180 = vpop.permute.xlu0 %179
    %181 = vset.pattern.permute.xlu0 0
    %182 = vperm.xlu0 %181, %v163
    %v183 = vpop.permute.xlu0 %182
    %184 = vset.pattern.permute.xlu0 0
    %185 = vperm.xlu0 %184, %v164
    %v186 = vpop.permute.xlu0 %185
    %187 = vset.pattern.permute.xlu0 0
    %188 = vperm.xlu0 %187, %v165
    %v189 = vpop.permute.xlu0 %188
    %190 = vset.pattern.permute.xlu0 0
    %191 = vperm.xlu0 %190, %v166
    %v192 = vpop.permute.xlu0 %191
    %193 = vset.pattern.permute.xlu0 0
    %194 = vperm.xlu0 %193, %v167
    %v195 = vpop.permute.xlu0 %194
    %196 = vset.pattern.permute.xlu0 0
    %197 = vperm.xlu0 %196, %v168
    %v198 = vpop.permute.xlu0 %197
    %199 = vset.pattern.permute.xlu0 0
    %200 = vperm.xlu0 %199, %v169
    %v201 = vpop.permute.xlu0 %200
    %202 = vset.pattern.permute.xlu0 0
    %203 = vperm.xlu0 %202, %v170
    %v204 = vpop.permute.xlu0 %203
    %205 = vset.pattern.permute.xlu0 0
    %206 = vperm.xlu0 %205, %v171
    %v207 = vpop.permute.xlu0 %206
    %208 = vset.pattern.permute.xlu0 0
    %209 = vperm.xlu0 %208, %v172
    %v210 = vpop.permute.xlu0 %209
    %211 = vset.pattern.permute.xlu0 0
    %212 = vperm.xlu0 %211, %v173
    %v213 = vpop.permute.xlu0 %212
    %214 = vset.pattern.permute.xlu0 0
    %215 = vperm.xlu0 %214, %v174
    %v216 = vpop.permute.xlu0 %215
    %217 = vset.pattern.permute.xlu0 0
    %218 = vperm.xlu0 %217, %v175
    %v219 = vpop.permute.xlu0 %218
    %220 = vset.pattern.permute.xlu0 0
    %221 = vperm.xlu0 %220, %v176
    %v222 = vpop.permute.xlu0 %221
    %223 = vset.pattern.permute.xlu0 0
    %224 = vperm.xlu0 %223, %v177
    %v225 = vpop.permute.xlu0 %224
    %vm226 = vcmp.eq.s32.totalorder %v180, 1
    %vm227 = vcmp.eq.s32.totalorder %v183, 1
    %vm228 = vcmp.eq.s32.totalorder %v186, 1
    %vm229 = vcmp.eq.s32.totalorder %v189, 1
    %vm230 = vcmp.eq.s32.totalorder %v192, 1
    %vm231 = vcmp.eq.s32.totalorder %v195, 1
    %vm232 = vcmp.eq.s32.totalorder %v198, 1
    %vm233 = vcmp.eq.s32.totalorder %v201, 1
    %vm234 = vcmp.eq.s32.totalorder %v204, 1
    %vm235 = vcmp.eq.s32.totalorder %v207, 1
    %vm236 = vcmp.eq.s32.totalorder %v210, 1
    %vm237 = vcmp.eq.s32.totalorder %v213, 1
    %vm238 = vcmp.eq.s32.totalorder %v216, 1
    %vm239 = vcmp.eq.s32.totalorder %v219, 1
    %vm240 = vcmp.eq.s32.totalorder %v222, 1
    %vm241 = vcmp.eq.s32.totalorder %v225, 1
    %v242 = vlaneseq
    %v243 = vshrl.u32 %v242, 7
    %v244 = vsub.s32 1, %v243
    %v245 = vrot.slane %v28, %v244
    %v246 = vsel %vm226, %v245, %v130
    %v247 = vsel %vm227, %v245, %v131
    %v248 = vsel %vm228, %v245, %v132
    %v249 = vsel %vm229, %v245, %v133
    %v250 = vsel %vm230, %v245, %v134
    %v251 = vsel %vm231, %v245, %v135
    %v252 = vsel %vm232, %v245, %v136
    %v253 = vsel %vm233, %v245, %v137
    %v254 = vsel %vm234, %v245, %v138
    %v255 = vsel %vm235, %v245, %v139
    %v256 = vsel %vm236, %v245, %v140
    %v257 = vsel %vm237, %v245, %v141
    %v258 = vsel %vm238, %v245, %v142
    %v259 = vsel %vm239, %v245, %v143
    %v260 = vsel %vm240, %v245, %v144
    %v261 = vsel %vm241, %v245, %v145
    %vm262 = vcmp.eq.s32.totalorder %v12, 2
    %vm263 = vcmp.eq.s32.totalorder %v13, 2
    %vm264 = vcmp.eq.s32.totalorder %v14, 2
    %vm265 = vcmp.eq.s32.totalorder %v15, 2
    %vm266 = vcmp.eq.s32.totalorder %v16, 2
    %vm267 = vcmp.eq.s32.totalorder %v17, 2
    %vm268 = vcmp.eq.s32.totalorder %v18, 2
    %vm269 = vcmp.eq.s32.totalorder %v19, 2
    %vm270 = vcmp.eq.s32.totalorder %v20, 2
    %vm271 = vcmp.eq.s32.totalorder %v21, 2
    %vm272 = vcmp.eq.s32.totalorder %v22, 2
    %vm273 = vcmp.eq.s32.totalorder %v23, 2
    %vm274 = vcmp.eq.s32.totalorder %v24, 2
    %vm275 = vcmp.eq.s32.totalorder %v25, 2
    %vm276 = vcmp.eq.s32.totalorder %v26, 2
    %vm277 = vcmp.eq.s32.totalorder %v27, 2
    %v278 = vsel %vm262, 1, 0
    %v279 = vsel %vm263, 1, 0
    %v280 = vsel %vm264, 1, 0
    %v281 = vsel %vm265, 1, 0
    %v282 = vsel %vm266, 1, 0
    %v283 = vsel %vm267, 1, 0
    %v284 = vsel %vm268, 1, 0
    %v285 = vsel %vm269, 1, 0
    %v286 = vsel %vm270, 1, 0
    %v287 = vsel %vm271, 1, 0
    %v288 = vsel %vm272, 1, 0
    %v289 = vsel %vm273, 1, 0
    %v290 = vsel %vm274, 1, 0
    %v291 = vsel %vm275, 1, 0
    %v292 = vsel %vm276, 1, 0
    %v293 = vsel %vm277, 1, 0
    %294 = vset.pattern.permute.xlu0 0
    %295 = vperm.xlu0 %294, %v278
    %v296 = vpop.permute.xlu0 %295
    %297 = vset.pattern.permute.xlu0 0
    %298 = vperm.xlu0 %297, %v279
    %v299 = vpop.permute.xlu0 %298
    %300 = vset.pattern.permute.xlu0 0
    %301 = vperm.xlu0 %300, %v280
    %v302 = vpop.permute.xlu0 %301
    %303 = vset.pattern.permute.xlu0 0
    %304 = vperm.xlu0 %303, %v281
    %v305 = vpop.permute.xlu0 %304
    %306 = vset.pattern.permute.xlu0 0
    %307 = vperm.xlu0 %306, %v282
    %v308 = vpop.permute.xlu0 %307
    %309 = vset.pattern.permute.xlu0 0
    %310 = vperm.xlu0 %309, %v283
    %v311 = vpop.permute.xlu0 %310
    %312 = vset.pattern.permute.xlu0 0
    %313 = vperm.xlu0 %312, %v284
    %v314 = vpop.permute.xlu0 %313
    %315 = vset.pattern.permute.xlu0 0
    %316 = vperm.xlu0 %315, %v285
    %v317 = vpop.permute.xlu0 %316
    %318 = vset.pattern.permute.xlu0 0
    %319 = vperm.xlu0 %318, %v286
    %v320 = vpop.permute.xlu0 %319
    %321 = vset.pattern.permute.xlu0 0
    %322 = vperm.xlu0 %321, %v287
    %v323 = vpop.permute.xlu0 %322
    %324 = vset.pattern.permute.xlu0 0
    %325 = vperm.xlu0 %324, %v288
    %v326 = vpop.permute.xlu0 %325
    %327 = vset.pattern.permute.xlu0 0
    %328 = vperm.xlu0 %327, %v289
    %v329 = vpop.permute.xlu0 %328
    %330 = vset.pattern.permute.xlu0 0
    %331 = vperm.xlu0 %330, %v290
    %v332 = vpop.permute.xlu0 %331
    %333 = vset.pattern.permute.xlu0 0
    %334 = vperm.xlu0 %333, %v291
    %v335 = vpop.permute.xlu0 %334
    %336 = vset.pattern.permute.xlu0 0
    %337 = vperm.xlu0 %336, %v292
    %v338 = vpop.permute.xlu0 %337
    %339 = vset.pattern.permute.xlu0 0
    %340 = vperm.xlu0 %339, %v293
    %v341 = vpop.permute.xlu0 %340
    %vm342 = vcmp.eq.s32.totalorder %v296, 1
    %vm343 = vcmp.eq.s32.totalorder %v299, 1
    %vm344 = vcmp.eq.s32.totalorder %v302, 1
    %vm345 = vcmp.eq.s32.totalorder %v305, 1
    %vm346 = vcmp.eq.s32.totalorder %v308, 1
    %vm347 = vcmp.eq.s32.totalorder %v311, 1
    %vm348 = vcmp.eq.s32.totalorder %v314, 1
    %vm349 = vcmp.eq.s32.totalorder %v317, 1
    %vm350 = vcmp.eq.s32.totalorder %v320, 1
    %vm351 = vcmp.eq.s32.totalorder %v323, 1
    %vm352 = vcmp.eq.s32.totalorder %v326, 1
    %vm353 = vcmp.eq.s32.totalorder %v329, 1
    %vm354 = vcmp.eq.s32.totalorder %v332, 1
    %vm355 = vcmp.eq.s32.totalorder %v335, 1
    %vm356 = vcmp.eq.s32.totalorder %v338, 1
    %vm357 = vcmp.eq.s32.totalorder %v341, 1
    %v358 = vlaneseq
    %v359 = vshrl.u32 %v358, 7
    %v360 = vsub.s32 2, %v359
    %v361 = vrot.slane %v28, %v360
    %v362 = vsel %vm342, %v361, %v246
    %v363 = vsel %vm343, %v361, %v247
    %v364 = vsel %vm344, %v361, %v248
    %v365 = vsel %vm345, %v361, %v249
    %v366 = vsel %vm346, %v361, %v250
    %v367 = vsel %vm347, %v361, %v251
    %v368 = vsel %vm348, %v361, %v252
    %v369 = vsel %vm349, %v361, %v253
    %v370 = vsel %vm350, %v361, %v254
    %v371 = vsel %vm351, %v361, %v255
    %v372 = vsel %vm352, %v361, %v256
    %v373 = vsel %vm353, %v361, %v257
    %v374 = vsel %vm354, %v361, %v258
    %v375 = vsel %vm355, %v361, %v259
    %v376 = vsel %vm356, %v361, %v260
    %v377 = vsel %vm357, %v361, %v261
    %vm378 = vcmp.eq.s32.totalorder %v12, 3
    %vm379 = vcmp.eq.s32.totalorder %v13, 3
    %vm380 = vcmp.eq.s32.totalorder %v14, 3
    %vm381 = vcmp.eq.s32.totalorder %v15, 3
    %vm382 = vcmp.eq.s32.totalorder %v16, 3
    %vm383 = vcmp.eq.s32.totalorder %v17, 3
    %vm384 = vcmp.eq.s32.totalorder %v18, 3
    %vm385 = vcmp.eq.s32.totalorder %v19, 3
    %vm386 = vcmp.eq.s32.totalorder %v20, 3
    %vm387 = vcmp.eq.s32.totalorder %v21, 3
    %vm388 = vcmp.eq.s32.totalorder %v22, 3
    %vm389 = vcmp.eq.s32.totalorder %v23, 3
    %vm390 = vcmp.eq.s32.totalorder %v24, 3
    %vm391 = vcmp.eq.s32.totalorder %v25, 3
    %vm392 = vcmp.eq.s32.totalorder %v26, 3
    %vm393 = vcmp.eq.s32.totalorder %v27, 3
    %v394 = vsel %vm378, 1, 0
    %v395 = vsel %vm379, 1, 0
    %v396 = vsel %vm380, 1, 0
    %v397 = vsel %vm381, 1, 0
    %v398 = vsel %vm382, 1, 0
    %v399 = vsel %vm383, 1, 0
    %v400 = vsel %vm384, 1, 0
    %v401 = vsel %vm385, 1, 0
    %v402 = vsel %vm386, 1, 0
    %v403 = vsel %vm387, 1, 0
    %v404 = vsel %vm388, 1, 0
    %v405 = vsel %vm389, 1, 0
    %v406 = vsel %vm390, 1, 0
    %v407 = vsel %vm391, 1, 0
    %v408 = vsel %vm392, 1, 0
    %v409 = vsel %vm393, 1, 0
    %410 = vset.pattern.permute.xlu0 0
    %411 = vperm.xlu0 %410, %v394
    %v412 = vpop.permute.xlu0 %411
    %413 = vset.pattern.permute.xlu0 0
    %414 = vperm.xlu0 %413, %v395
    %v415 = vpop.permute.xlu0 %414
    %416 = vset.pattern.permute.xlu0 0
    %417 = vperm.xlu0 %416, %v396
    %v418 = vpop.permute.xlu0 %417
    %419 = vset.pattern.permute.xlu0 0
    %420 = vperm.xlu0 %419, %v397
    %v421 = vpop.permute.xlu0 %420
    %422 = vset.pattern.permute.xlu0 0
    %423 = vperm.xlu0 %422, %v398
    %v424 = vpop.permute.xlu0 %423
    %425 = vset.pattern.permute.xlu0 0
    %426 = vperm.xlu0 %425, %v399
    %v427 = vpop.permute.xlu0 %426
    %428 = vset.pattern.permute.xlu0 0
    %429 = vperm.xlu0 %428, %v400
    %v430 = vpop.permute.xlu0 %429
    %431 = vset.pattern.permute.xlu0 0
    %432 = vperm.xlu0 %431, %v401
    %v433 = vpop.permute.xlu0 %432
    %434 = vset.pattern.permute.xlu0 0
    %435 = vperm.xlu0 %434, %v402
    %v436 = vpop.permute.xlu0 %435
    %437 = vset.pattern.permute.xlu0 0
    %438 = vperm.xlu0 %437, %v403
    %v439 = vpop.permute.xlu0 %438
    %440 = vset.pattern.permute.xlu0 0
    %441 = vperm.xlu0 %440, %v404
    %v442 = vpop.permute.xlu0 %441
    %443 = vset.pattern.permute.xlu0 0
    %444 = vperm.xlu0 %443, %v405
    %v445 = vpop.permute.xlu0 %444
    %446 = vset.pattern.permute.xlu0 0
    %447 = vperm.xlu0 %446, %v406
    %v448 = vpop.permute.xlu0 %447
    %449 = vset.pattern.permute.xlu0 0
    %450 = vperm.xlu0 %449, %v407
    %v451 = vpop.permute.xlu0 %450
    %452 = vset.pattern.permute.xlu0 0
    %453 = vperm.xlu0 %452, %v408
    %v454 = vpop.permute.xlu0 %453
    %455 = vset.pattern.permute.xlu0 0
    %456 = vperm.xlu0 %455, %v409
    %v457 = vpop.permute.xlu0 %456
    %vm458 = vcmp.eq.s32.totalorder %v412, 1
    %vm459 = vcmp.eq.s32.totalorder %v415, 1
    %vm460 = vcmp.eq.s32.totalorder %v418, 1
    %vm461 = vcmp.eq.s32.totalorder %v421, 1
    %vm462 = vcmp.eq.s32.totalorder %v424, 1
    %vm463 = vcmp.eq.s32.totalorder %v427, 1
    %vm464 = vcmp.eq.s32.totalorder %v430, 1
    %vm465 = vcmp.eq.s32.totalorder %v433, 1
    %vm466 = vcmp.eq.s32.totalorder %v436, 1
    %vm467 = vcmp.eq.s32.totalorder %v439, 1
    %vm468 = vcmp.eq.s32.totalorder %v442, 1
    %vm469 = vcmp.eq.s32.totalorder %v445, 1
    %vm470 = vcmp.eq.s32.totalorder %v448, 1
    %vm471 = vcmp.eq.s32.totalorder %v451, 1
    %vm472 = vcmp.eq.s32.totalorder %v454, 1
    %vm473 = vcmp.eq.s32.totalorder %v457, 1
    %v474 = vlaneseq
    %v475 = vshrl.u32 %v474, 7
    %v476 = vsub.s32 3, %v475
    %v477 = vrot.slane %v28, %v476
    %v478 = vsel %vm458, %v477, %v362
    %v479 = vsel %vm459, %v477, %v363
    %v480 = vsel %vm460, %v477, %v364
    %v481 = vsel %vm461, %v477, %v365
    %v482 = vsel %vm462, %v477, %v366
    %v483 = vsel %vm463, %v477, %v367
    %v484 = vsel %vm464, %v477, %v368
    %v485 = vsel %vm465, %v477, %v369
    %v486 = vsel %vm466, %v477, %v370
    %v487 = vsel %vm467, %v477, %v371
    %v488 = vsel %vm468, %v477, %v372
    %v489 = vsel %vm469, %v477, %v373
    %v490 = vsel %vm470, %v477, %v374
    %v491 = vsel %vm471, %v477, %v375
    %v492 = vsel %vm472, %v477, %v376
    %v493 = vsel %vm473, %v477, %v377
    %vm494 = vcmp.eq.s32.totalorder %v12, 4
    %vm495 = vcmp.eq.s32.totalorder %v13, 4
    %vm496 = vcmp.eq.s32.totalorder %v14, 4
    %vm497 = vcmp.eq.s32.totalorder %v15, 4
    %vm498 = vcmp.eq.s32.totalorder %v16, 4
    %vm499 = vcmp.eq.s32.totalorder %v17, 4
    %vm500 = vcmp.eq.s32.totalorder %v18, 4
    %vm501 = vcmp.eq.s32.totalorder %v19, 4
    %vm502 = vcmp.eq.s32.totalorder %v20, 4
    %vm503 = vcmp.eq.s32.totalorder %v21, 4
    %vm504 = vcmp.eq.s32.totalorder %v22, 4
    %vm505 = vcmp.eq.s32.totalorder %v23, 4
    %vm506 = vcmp.eq.s32.totalorder %v24, 4
    %vm507 = vcmp.eq.s32.totalorder %v25, 4
    %vm508 = vcmp.eq.s32.totalorder %v26, 4
    %vm509 = vcmp.eq.s32.totalorder %v27, 4
    %v510 = vsel %vm494, 1, 0
    %v511 = vsel %vm495, 1, 0
    %v512 = vsel %vm496, 1, 0
    %v513 = vsel %vm497, 1, 0
    %v514 = vsel %vm498, 1, 0
    %v515 = vsel %vm499, 1, 0
    %v516 = vsel %vm500, 1, 0
    %v517 = vsel %vm501, 1, 0
    %v518 = vsel %vm502, 1, 0
    %v519 = vsel %vm503, 1, 0
    %v520 = vsel %vm504, 1, 0
    %v521 = vsel %vm505, 1, 0
    %v522 = vsel %vm506, 1, 0
    %v523 = vsel %vm507, 1, 0
    %v524 = vsel %vm508, 1, 0
    %v525 = vsel %vm509, 1, 0
    %526 = vset.pattern.permute.xlu0 0
    %527 = vperm.xlu0 %526, %v510
    %v528 = vpop.permute.xlu0 %527
    %529 = vset.pattern.permute.xlu0 0
    %530 = vperm.xlu0 %529, %v511
    %v531 = vpop.permute.xlu0 %530
    %532 = vset.pattern.permute.xlu0 0
    %533 = vperm.xlu0 %532, %v512
    %v534 = vpop.permute.xlu0 %533
    %535 = vset.pattern.permute.xlu0 0
    %536 = vperm.xlu0 %535, %v513
    %v537 = vpop.permute.xlu0 %536
    %538 = vset.pattern.permute.xlu0 0
    %539 = vperm.xlu0 %538, %v514
    %v540 = vpop.permute.xlu0 %539
    %541 = vset.pattern.permute.xlu0 0
    %542 = vperm.xlu0 %541, %v515
    %v543 = vpop.permute.xlu0 %542
    %544 = vset.pattern.permute.xlu0 0
    %545 = vperm.xlu0 %544, %v516
    %v546 = vpop.permute.xlu0 %545
    %547 = vset.pattern.permute.xlu0 0
    %548 = vperm.xlu0 %547, %v517
    %v549 = vpop.permute.xlu0 %548
    %550 = vset.pattern.permute.xlu0 0
    %551 = vperm.xlu0 %550, %v518
    %v552 = vpop.permute.xlu0 %551
    %553 = vset.pattern.permute.xlu0 0
    %554 = vperm.xlu0 %553, %v519
    %v555 = vpop.permute.xlu0 %554
    %556 = vset.pattern.permute.xlu0 0
    %557 = vperm.xlu0 %556, %v520
    %v558 = vpop.permute.xlu0 %557
    %559 = vset.pattern.permute.xlu0 0
    %560 = vperm.xlu0 %559, %v521
    %v561 = vpop.permute.xlu0 %560
    %562 = vset.pattern.permute.xlu0 0
    %563 = vperm.xlu0 %562, %v522
    %v564 = vpop.permute.xlu0 %563
    %565 = vset.pattern.permute.xlu0 0
    %566 = vperm.xlu0 %565, %v523
    %v567 = vpop.permute.xlu0 %566
    %568 = vset.pattern.permute.xlu0 0
    %569 = vperm.xlu0 %568, %v524
    %v570 = vpop.permute.xlu0 %569
    %571 = vset.pattern.permute.xlu0 0
    %572 = vperm.xlu0 %571, %v525
    %v573 = vpop.permute.xlu0 %572
    %vm574 = vcmp.eq.s32.totalorder %v528, 1
    %vm575 = vcmp.eq.s32.totalorder %v531, 1
    %vm576 = vcmp.eq.s32.totalorder %v534, 1
    %vm577 = vcmp.eq.s32.totalorder %v537, 1
    %vm578 = vcmp.eq.s32.totalorder %v540, 1
    %vm579 = vcmp.eq.s32.totalorder %v543, 1
    %vm580 = vcmp.eq.s32.totalorder %v546, 1
    %vm581 = vcmp.eq.s32.totalorder %v549, 1
    %vm582 = vcmp.eq.s32.totalorder %v552, 1
    %vm583 = vcmp.eq.s32.totalorder %v555, 1
    %vm584 = vcmp.eq.s32.totalorder %v558, 1
    %vm585 = vcmp.eq.s32.totalorder %v561, 1
    %vm586 = vcmp.eq.s32.totalorder %v564, 1
    %vm587 = vcmp.eq.s32.totalorder %v567, 1
    %vm588 = vcmp.eq.s32.totalorder %v570, 1
    %vm589 = vcmp.eq.s32.totalorder %v573, 1
    %v590 = vlaneseq
    %v591 = vshrl.u32 %v590, 7
    %v592 = vsub.s32 4, %v591
    %v593 = vrot.slane %v28, %v592
    %v594 = vsel %vm574, %v593, %v478
    %v595 = vsel %vm575, %v593, %v479
    %v596 = vsel %vm576, %v593, %v480
    %v597 = vsel %vm577, %v593, %v481
    %v598 = vsel %vm578, %v593, %v482
    %v599 = vsel %vm579, %v593, %v483
    %v600 = vsel %vm580, %v593, %v484
    %v601 = vsel %vm581, %v593, %v485
    %v602 = vsel %vm582, %v593, %v486
    %v603 = vsel %vm583, %v593, %v487
    %v604 = vsel %vm584, %v593, %v488
    %v605 = vsel %vm585, %v593, %v489
    %v606 = vsel %vm586, %v593, %v490
    %v607 = vsel %vm587, %v593, %v491
    %v608 = vsel %vm588, %v593, %v492
    %v609 = vsel %vm589, %v593, %v493
    %vm610 = vcmp.eq.s32.totalorder %v12, 5
    %vm611 = vcmp.eq.s32.totalorder %v13, 5
    %vm612 = vcmp.eq.s32.totalorder %v14, 5
    %vm613 = vcmp.eq.s32.totalorder %v15, 5
    %vm614 = vcmp.eq.s32.totalorder %v16, 5
    %vm615 = vcmp.eq.s32.totalorder %v17, 5
    %vm616 = vcmp.eq.s32.totalorder %v18, 5
    %vm617 = vcmp.eq.s32.totalorder %v19, 5
    %vm618 = vcmp.eq.s32.totalorder %v20, 5
    %vm619 = vcmp.eq.s32.totalorder %v21, 5
    %vm620 = vcmp.eq.s32.totalorder %v22, 5
    %vm621 = vcmp.eq.s32.totalorder %v23, 5
    %vm622 = vcmp.eq.s32.totalorder %v24, 5
    %vm623 = vcmp.eq.s32.totalorder %v25, 5
    %vm624 = vcmp.eq.s32.totalorder %v26, 5
    %vm625 = vcmp.eq.s32.totalorder %v27, 5
    %v626 = vsel %vm610, 1, 0
    %v627 = vsel %vm611, 1, 0
    %v628 = vsel %vm612, 1, 0
    %v629 = vsel %vm613, 1, 0
    %v630 = vsel %vm614, 1, 0
    %v631 = vsel %vm615, 1, 0
    %v632 = vsel %vm616, 1, 0
    %v633 = vsel %vm617, 1, 0
    %v634 = vsel %vm618, 1, 0
    %v635 = vsel %vm619, 1, 0
    %v636 = vsel %vm620, 1, 0
    %v637 = vsel %vm621, 1, 0
    %v638 = vsel %vm622, 1, 0
    %v639 = vsel %vm623, 1, 0
    %v640 = vsel %vm624, 1, 0
    %v641 = vsel %vm625, 1, 0
    %642 = vset.pattern.permute.xlu0 0
    %643 = vperm.xlu0 %642, %v626
    %v644 = vpop.permute.xlu0 %643
    %645 = vset.pattern.permute.xlu0 0
    %646 = vperm.xlu0 %645, %v627
    %v647 = vpop.permute.xlu0 %646
    %648 = vset.pattern.permute.xlu0 0
    %649 = vperm.xlu0 %648, %v628
    %v650 = vpop.permute.xlu0 %649
    %651 = vset.pattern.permute.xlu0 0
    %652 = vperm.xlu0 %651, %v629
    %v653 = vpop.permute.xlu0 %652
    %654 = vset.pattern.permute.xlu0 0
    %655 = vperm.xlu0 %654, %v630
    %v656 = vpop.permute.xlu0 %655
    %657 = vset.pattern.permute.xlu0 0
    %658 = vperm.xlu0 %657, %v631
    %v659 = vpop.permute.xlu0 %658
    %660 = vset.pattern.permute.xlu0 0
    %661 = vperm.xlu0 %660, %v632
    %v662 = vpop.permute.xlu0 %661
    %663 = vset.pattern.permute.xlu0 0
    %664 = vperm.xlu0 %663, %v633
    %v665 = vpop.permute.xlu0 %664
    %666 = vset.pattern.permute.xlu0 0
    %667 = vperm.xlu0 %666, %v634
    %v668 = vpop.permute.xlu0 %667
    %669 = vset.pattern.permute.xlu0 0
    %670 = vperm.xlu0 %669, %v635
    %v671 = vpop.permute.xlu0 %670
    %672 = vset.pattern.permute.xlu0 0
    %673 = vperm.xlu0 %672, %v636
    %v674 = vpop.permute.xlu0 %673
    %675 = vset.pattern.permute.xlu0 0
    %676 = vperm.xlu0 %675, %v637
    %v677 = vpop.permute.xlu0 %676
    %678 = vset.pattern.permute.xlu0 0
    %679 = vperm.xlu0 %678, %v638
    %v680 = vpop.permute.xlu0 %679
    %681 = vset.pattern.permute.xlu0 0
    %682 = vperm.xlu0 %681, %v639
    %v683 = vpop.permute.xlu0 %682
    %684 = vset.pattern.permute.xlu0 0
    %685 = vperm.xlu0 %684, %v640
    %v686 = vpop.permute.xlu0 %685
    %687 = vset.pattern.permute.xlu0 0
    %688 = vperm.xlu0 %687, %v641
    %v689 = vpop.permute.xlu0 %688
    %vm690 = vcmp.eq.s32.totalorder %v644, 1
    %vm691 = vcmp.eq.s32.totalorder %v647, 1
    %vm692 = vcmp.eq.s32.totalorder %v650, 1
    %vm693 = vcmp.eq.s32.totalorder %v653, 1
    %vm694 = vcmp.eq.s32.totalorder %v656, 1
    %vm695 = vcmp.eq.s32.totalorder %v659, 1
    %vm696 = vcmp.eq.s32.totalorder %v662, 1
    %vm697 = vcmp.eq.s32.totalorder %v665, 1
    %vm698 = vcmp.eq.s32.totalorder %v668, 1
    %vm699 = vcmp.eq.s32.totalorder %v671, 1
    %vm700 = vcmp.eq.s32.totalorder %v674, 1
    %vm701 = vcmp.eq.s32.totalorder %v677, 1
    %vm702 = vcmp.eq.s32.totalorder %v680, 1
    %vm703 = vcmp.eq.s32.totalorder %v683, 1
    %vm704 = vcmp.eq.s32.totalorder %v686, 1
    %vm705 = vcmp.eq.s32.totalorder %v689, 1
    %v706 = vlaneseq
    %v707 = vshrl.u32 %v706, 7
    %v708 = vsub.s32 5, %v707
    %v709 = vrot.slane %v28, %v708
    %v710 = vsel %vm690, %v709, %v594
    %v711 = vsel %vm691, %v709, %v595
    %v712 = vsel %vm692, %v709, %v596
    %v713 = vsel %vm693, %v709, %v597
    %v714 = vsel %vm694, %v709, %v598
    %v715 = vsel %vm695, %v709, %v599
    %v716 = vsel %vm696, %v709, %v600
    %v717 = vsel %vm697, %v709, %v601
    %v718 = vsel %vm698, %v709, %v602
    %v719 = vsel %vm699, %v709, %v603
    %v720 = vsel %vm700, %v709, %v604
    %v721 = vsel %vm701, %v709, %v605
    %v722 = vsel %vm702, %v709, %v606
    %v723 = vsel %vm703, %v709, %v607
    %v724 = vsel %vm704, %v709, %v608
    %v725 = vsel %vm705, %v709, %v609
    %vm726 = vcmp.eq.s32.totalorder %v12, 6
    %vm727 = vcmp.eq.s32.totalorder %v13, 6
    %vm728 = vcmp.eq.s32.totalorder %v14, 6
    %vm729 = vcmp.eq.s32.totalorder %v15, 6
    %vm730 = vcmp.eq.s32.totalorder %v16, 6
    %vm731 = vcmp.eq.s32.totalorder %v17, 6
    %vm732 = vcmp.eq.s32.totalorder %v18, 6
    %vm733 = vcmp.eq.s32.totalorder %v19, 6
    %vm734 = vcmp.eq.s32.totalorder %v20, 6
    %vm735 = vcmp.eq.s32.totalorder %v21, 6
    %vm736 = vcmp.eq.s32.totalorder %v22, 6
    %vm737 = vcmp.eq.s32.totalorder %v23, 6
    %vm738 = vcmp.eq.s32.totalorder %v24, 6
    %vm739 = vcmp.eq.s32.totalorder %v25, 6
    %vm740 = vcmp.eq.s32.totalorder %v26, 6
    %vm741 = vcmp.eq.s32.totalorder %v27, 6
    %v742 = vsel %vm726, 1, 0
    %v743 = vsel %vm727, 1, 0
    %v744 = vsel %vm728, 1, 0
    %v745 = vsel %vm729, 1, 0
    %v746 = vsel %vm730, 1, 0
    %v747 = vsel %vm731, 1, 0
    %v748 = vsel %vm732, 1, 0
    %v749 = vsel %vm733, 1, 0
    %v750 = vsel %vm734, 1, 0
    %v751 = vsel %vm735, 1, 0
    %v752 = vsel %vm736, 1, 0
    %v753 = vsel %vm737, 1, 0
    %v754 = vsel %vm738, 1, 0
    %v755 = vsel %vm739, 1, 0
    %v756 = vsel %vm740, 1, 0
    %v757 = vsel %vm741, 1, 0
    %758 = vset.pattern.permute.xlu0 0
    %759 = vperm.xlu0 %758, %v742
    %v760 = vpop.permute.xlu0 %759
    %761 = vset.pattern.permute.xlu0 0
    %762 = vperm.xlu0 %761, %v743
    %v763 = vpop.permute.xlu0 %762
    %764 = vset.pattern.permute.xlu0 0
    %765 = vperm.xlu0 %764, %v744
    %v766 = vpop.permute.xlu0 %765
    %767 = vset.pattern.permute.xlu0 0
    %768 = vperm.xlu0 %767, %v745
    %v769 = vpop.permute.xlu0 %768
    %770 = vset.pattern.permute.xlu0 0
    %771 = vperm.xlu0 %770, %v746
    %v772 = vpop.permute.xlu0 %771
    %773 = vset.pattern.permute.xlu0 0
    %774 = vperm.xlu0 %773, %v747
    %v775 = vpop.permute.xlu0 %774
    %776 = vset.pattern.permute.xlu0 0
    %777 = vperm.xlu0 %776, %v748
    %v778 = vpop.permute.xlu0 %777
    %779 = vset.pattern.permute.xlu0 0
    %780 = vperm.xlu0 %779, %v749
    %v781 = vpop.permute.xlu0 %780
    %782 = vset.pattern.permute.xlu0 0
    %783 = vperm.xlu0 %782, %v750
    %v784 = vpop.permute.xlu0 %783
    %785 = vset.pattern.permute.xlu0 0
    %786 = vperm.xlu0 %785, %v751
    %v787 = vpop.permute.xlu0 %786
    %788 = vset.pattern.permute.xlu0 0
    %789 = vperm.xlu0 %788, %v752
    %v790 = vpop.permute.xlu0 %789
    %791 = vset.pattern.permute.xlu0 0
    %792 = vperm.xlu0 %791, %v753
    %v793 = vpop.permute.xlu0 %792
    %794 = vset.pattern.permute.xlu0 0
    %795 = vperm.xlu0 %794, %v754
    %v796 = vpop.permute.xlu0 %795
    %797 = vset.pattern.permute.xlu0 0
    %798 = vperm.xlu0 %797, %v755
    %v799 = vpop.permute.xlu0 %798
    %800 = vset.pattern.permute.xlu0 0
    %801 = vperm.xlu0 %800, %v756
    %v802 = vpop.permute.xlu0 %801
    %803 = vset.pattern.permute.xlu0 0
    %804 = vperm.xlu0 %803, %v757
    %v805 = vpop.permute.xlu0 %804
    %vm806 = vcmp.eq.s32.totalorder %v760, 1
    %vm807 = vcmp.eq.s32.totalorder %v763, 1
    %vm808 = vcmp.eq.s32.totalorder %v766, 1
    %vm809 = vcmp.eq.s32.totalorder %v769, 1
    %vm810 = vcmp.eq.s32.totalorder %v772, 1
    %vm811 = vcmp.eq.s32.totalorder %v775, 1
    %vm812 = vcmp.eq.s32.totalorder %v778, 1
    %vm813 = vcmp.eq.s32.totalorder %v781, 1
    %vm814 = vcmp.eq.s32.totalorder %v784, 1
    %vm815 = vcmp.eq.s32.totalorder %v787, 1
    %vm816 = vcmp.eq.s32.totalorder %v790, 1
    %vm817 = vcmp.eq.s32.totalorder %v793, 1
    %vm818 = vcmp.eq.s32.totalorder %v796, 1
    %vm819 = vcmp.eq.s32.totalorder %v799, 1
    %vm820 = vcmp.eq.s32.totalorder %v802, 1
    %vm821 = vcmp.eq.s32.totalorder %v805, 1
    %v822 = vlaneseq
    %v823 = vshrl.u32 %v822, 7
    %v824 = vsub.s32 6, %v823
    %v825 = vrot.slane %v28, %v824
    %v826 = vsel %vm806, %v825, %v710
    %v827 = vsel %vm807, %v825, %v711
    %v828 = vsel %vm808, %v825, %v712
    %v829 = vsel %vm809, %v825, %v713
    %v830 = vsel %vm810, %v825, %v714
    %v831 = vsel %vm811, %v825, %v715
    %v832 = vsel %vm812, %v825, %v716
    %v833 = vsel %vm813, %v825, %v717
    %v834 = vsel %vm814, %v825, %v718
    %v835 = vsel %vm815, %v825, %v719
    %v836 = vsel %vm816, %v825, %v720
    %v837 = vsel %vm817, %v825, %v721
    %v838 = vsel %vm818, %v825, %v722
    %v839 = vsel %vm819, %v825, %v723
    %v840 = vsel %vm820, %v825, %v724
    %v841 = vsel %vm821, %v825, %v725
    %vm842 = vcmp.eq.s32.totalorder %v12, 7
    %vm843 = vcmp.eq.s32.totalorder %v13, 7
    %vm844 = vcmp.eq.s32.totalorder %v14, 7
    %vm845 = vcmp.eq.s32.totalorder %v15, 7
    %vm846 = vcmp.eq.s32.totalorder %v16, 7
    %vm847 = vcmp.eq.s32.totalorder %v17, 7
    %vm848 = vcmp.eq.s32.totalorder %v18, 7
    %vm849 = vcmp.eq.s32.totalorder %v19, 7
    %vm850 = vcmp.eq.s32.totalorder %v20, 7
    %vm851 = vcmp.eq.s32.totalorder %v21, 7
    %vm852 = vcmp.eq.s32.totalorder %v22, 7
    %vm853 = vcmp.eq.s32.totalorder %v23, 7
    %vm854 = vcmp.eq.s32.totalorder %v24, 7
    %vm855 = vcmp.eq.s32.totalorder %v25, 7
    %vm856 = vcmp.eq.s32.totalorder %v26, 7
    %vm857 = vcmp.eq.s32.totalorder %v27, 7
    %v858 = vsel %vm842, 1, 0
    %v859 = vsel %vm843, 1, 0
    %v860 = vsel %vm844, 1, 0
    %v861 = vsel %vm845, 1, 0
    %v862 = vsel %vm846, 1, 0
    %v863 = vsel %vm847, 1, 0
    %v864 = vsel %vm848, 1, 0
    %v865 = vsel %vm849, 1, 0
    %v866 = vsel %vm850, 1, 0
    %v867 = vsel %vm851, 1, 0
    %v868 = vsel %vm852, 1, 0
    %v869 = vsel %vm853, 1, 0
    %v870 = vsel %vm854, 1, 0
    %v871 = vsel %vm855, 1, 0
    %v872 = vsel %vm856, 1, 0
    %v873 = vsel %vm857, 1, 0
    %874 = vset.pattern.permute.xlu0 0
    %875 = vperm.xlu0 %874, %v858
    %v876 = vpop.permute.xlu0 %875
    %877 = vset.pattern.permute.xlu0 0
    %878 = vperm.xlu0 %877, %v859
    %v879 = vpop.permute.xlu0 %878
    %880 = vset.pattern.permute.xlu0 0
    %881 = vperm.xlu0 %880, %v860
    %v882 = vpop.permute.xlu0 %881
    %883 = vset.pattern.permute.xlu0 0
    %884 = vperm.xlu0 %883, %v861
    %v885 = vpop.permute.xlu0 %884
    %886 = vset.pattern.permute.xlu0 0
    %887 = vperm.xlu0 %886, %v862
    %v888 = vpop.permute.xlu0 %887
    %889 = vset.pattern.permute.xlu0 0
    %890 = vperm.xlu0 %889, %v863
    %v891 = vpop.permute.xlu0 %890
    %892 = vset.pattern.permute.xlu0 0
    %893 = vperm.xlu0 %892, %v864
    %v894 = vpop.permute.xlu0 %893
    %895 = vset.pattern.permute.xlu0 0
    %896 = vperm.xlu0 %895, %v865
    %v897 = vpop.permute.xlu0 %896
    %898 = vset.pattern.permute.xlu0 0
    %899 = vperm.xlu0 %898, %v866
    %v900 = vpop.permute.xlu0 %899
    %901 = vset.pattern.permute.xlu0 0
    %902 = vperm.xlu0 %901, %v867
    %v903 = vpop.permute.xlu0 %902
    %904 = vset.pattern.permute.xlu0 0
    %905 = vperm.xlu0 %904, %v868
    %v906 = vpop.permute.xlu0 %905
    %907 = vset.pattern.permute.xlu0 0
    %908 = vperm.xlu0 %907, %v869
    %v909 = vpop.permute.xlu0 %908
    %910 = vset.pattern.permute.xlu0 0
    %911 = vperm.xlu0 %910, %v870
    %v912 = vpop.permute.xlu0 %911
    %913 = vset.pattern.permute.xlu0 0
    %914 = vperm.xlu0 %913, %v871
    %v915 = vpop.permute.xlu0 %914
    %916 = vset.pattern.permute.xlu0 0
    %917 = vperm.xlu0 %916, %v872
    %v918 = vpop.permute.xlu0 %917
    %919 = vset.pattern.permute.xlu0 0
    %920 = vperm.xlu0 %919, %v873
    %v921 = vpop.permute.xlu0 %920
    %vm922 = vcmp.eq.s32.totalorder %v876, 1
    %vm923 = vcmp.eq.s32.totalorder %v879, 1
    %vm924 = vcmp.eq.s32.totalorder %v882, 1
    %vm925 = vcmp.eq.s32.totalorder %v885, 1
    %vm926 = vcmp.eq.s32.totalorder %v888, 1
    %vm927 = vcmp.eq.s32.totalorder %v891, 1
    %vm928 = vcmp.eq.s32.totalorder %v894, 1
    %vm929 = vcmp.eq.s32.totalorder %v897, 1
    %vm930 = vcmp.eq.s32.totalorder %v900, 1
    %vm931 = vcmp.eq.s32.totalorder %v903, 1
    %vm932 = vcmp.eq.s32.totalorder %v906, 1
    %vm933 = vcmp.eq.s32.totalorder %v909, 1
    %vm934 = vcmp.eq.s32.totalorder %v912, 1
    %vm935 = vcmp.eq.s32.totalorder %v915, 1
    %vm936 = vcmp.eq.s32.totalorder %v918, 1
    %vm937 = vcmp.eq.s32.totalorder %v921, 1
    %v938 = vlaneseq
    %v939 = vshrl.u32 %v938, 7
    %v940 = vsub.s32 7, %v939
    %v941 = vrot.slane %v28, %v940
    %v942 = vsel %vm922, %v941, %v826
    %v943 = vsel %vm923, %v941, %v827
    %v944 = vsel %vm924, %v941, %v828
    %v945 = vsel %vm925, %v941, %v829
    %v946 = vsel %vm926, %v941, %v830
    %v947 = vsel %vm927, %v941, %v831
    %v948 = vsel %vm928, %v941, %v832
    %v949 = vsel %vm929, %v941, %v833
    %v950 = vsel %vm930, %v941, %v834
    %v951 = vsel %vm931, %v941, %v835
    %v952 = vsel %vm932, %v941, %v836
    %v953 = vsel %vm933, %v941, %v837
    %v954 = vsel %vm934, %v941, %v838
    %v955 = vsel %vm935, %v941, %v839
    %v956 = vsel %vm936, %v941, %v840
    %v957 = vsel %vm937, %v941, %v841
    %vm958 = vcmp.eq.s32.totalorder %v12, 8
    %vm959 = vcmp.eq.s32.totalorder %v13, 8
    %vm960 = vcmp.eq.s32.totalorder %v14, 8
    %vm961 = vcmp.eq.s32.totalorder %v15, 8
    %vm962 = vcmp.eq.s32.totalorder %v16, 8
    %vm963 = vcmp.eq.s32.totalorder %v17, 8
    %vm964 = vcmp.eq.s32.totalorder %v18, 8
    %vm965 = vcmp.eq.s32.totalorder %v19, 8
    %vm966 = vcmp.eq.s32.totalorder %v20, 8
    %vm967 = vcmp.eq.s32.totalorder %v21, 8
    %vm968 = vcmp.eq.s32.totalorder %v22, 8
    %vm969 = vcmp.eq.s32.totalorder %v23, 8
    %vm970 = vcmp.eq.s32.totalorder %v24, 8
    %vm971 = vcmp.eq.s32.totalorder %v25, 8
    %vm972 = vcmp.eq.s32.totalorder %v26, 8
    %vm973 = vcmp.eq.s32.totalorder %v27, 8
    %v974 = vsel %vm958, 1, 0
    %v975 = vsel %vm959, 1, 0
    %v976 = vsel %vm960, 1, 0
    %v977 = vsel %vm961, 1, 0
    %v978 = vsel %vm962, 1, 0
    %v979 = vsel %vm963, 1, 0
    %v980 = vsel %vm964, 1, 0
    %v981 = vsel %vm965, 1, 0
    %v982 = vsel %vm966, 1, 0
    %v983 = vsel %vm967, 1, 0
    %v984 = vsel %vm968, 1, 0
    %v985 = vsel %vm969, 1, 0
    %v986 = vsel %vm970, 1, 0
    %v987 = vsel %vm971, 1, 0
    %v988 = vsel %vm972, 1, 0
    %v989 = vsel %vm973, 1, 0
    %990 = vset.pattern.permute.xlu0 0
    %991 = vperm.xlu0 %990, %v974
    %v992 = vpop.permute.xlu0 %991
    %993 = vset.pattern.permute.xlu0 0
    %994 = vperm.xlu0 %993, %v975
    %v995 = vpop.permute.xlu0 %994
    %996 = vset.pattern.permute.xlu0 0
    %997 = vperm.xlu0 %996, %v976
    %v998 = vpop.permute.xlu0 %997
    %999 = vset.pattern.permute.xlu0 0
    %1000 = vperm.xlu0 %999, %v977
    %v1001 = vpop.permute.xlu0 %1000
    %1002 = vset.pattern.permute.xlu0 0
    %1003 = vperm.xlu0 %1002, %v978
    %v1004 = vpop.permute.xlu0 %1003
    %1005 = vset.pattern.permute.xlu0 0
    %1006 = vperm.xlu0 %1005, %v979
    %v1007 = vpop.permute.xlu0 %1006
    %1008 = vset.pattern.permute.xlu0 0
    %1009 = vperm.xlu0 %1008, %v980
    %v1010 = vpop.permute.xlu0 %1009
    %1011 = vset.pattern.permute.xlu0 0
    %1012 = vperm.xlu0 %1011, %v981
    %v1013 = vpop.permute.xlu0 %1012
    %1014 = vset.pattern.permute.xlu0 0
    %1015 = vperm.xlu0 %1014, %v982
    %v1016 = vpop.permute.xlu0 %1015
    %1017 = vset.pattern.permute.xlu0 0
    %1018 = vperm.xlu0 %1017, %v983
    %v1019 = vpop.permute.xlu0 %1018
    %1020 = vset.pattern.permute.xlu0 0
    %1021 = vperm.xlu0 %1020, %v984
    %v1022 = vpop.permute.xlu0 %1021
    %1023 = vset.pattern.permute.xlu0 0
    %1024 = vperm.xlu0 %1023, %v985
    %v1025 = vpop.permute.xlu0 %1024
    %1026 = vset.pattern.permute.xlu0 0
    %1027 = vperm.xlu0 %1026, %v986
    %v1028 = vpop.permute.xlu0 %1027
    %1029 = vset.pattern.permute.xlu0 0
    %1030 = vperm.xlu0 %1029, %v987
    %v1031 = vpop.permute.xlu0 %1030
    %1032 = vset.pattern.permute.xlu0 0
    %1033 = vperm.xlu0 %1032, %v988
    %v1034 = vpop.permute.xlu0 %1033
    %1035 = vset.pattern.permute.xlu0 0
    %1036 = vperm.xlu0 %1035, %v989
    %v1037 = vpop.permute.xlu0 %1036
    %vm1038 = vcmp.eq.s32.totalorder %v992, 1
    %vm1039 = vcmp.eq.s32.totalorder %v995, 1
    %vm1040 = vcmp.eq.s32.totalorder %v998, 1
    %vm1041 = vcmp.eq.s32.totalorder %v1001, 1
    %vm1042 = vcmp.eq.s32.totalorder %v1004, 1
    %vm1043 = vcmp.eq.s32.totalorder %v1007, 1
    %vm1044 = vcmp.eq.s32.totalorder %v1010, 1
    %vm1045 = vcmp.eq.s32.totalorder %v1013, 1
    %vm1046 = vcmp.eq.s32.totalorder %v1016, 1
    %vm1047 = vcmp.eq.s32.totalorder %v1019, 1
    %vm1048 = vcmp.eq.s32.totalorder %v1022, 1
    %vm1049 = vcmp.eq.s32.totalorder %v1025, 1
    %vm1050 = vcmp.eq.s32.totalorder %v1028, 1
    %vm1051 = vcmp.eq.s32.totalorder %v1031, 1
    %vm1052 = vcmp.eq.s32.totalorder %v1034, 1
    %vm1053 = vcmp.eq.s32.totalorder %v1037, 1
    %v1054 = vlaneseq
    %v1055 = vshrl.u32 %v1054, 7
    %v1056 = vsub.s32 0, %v1055
    %v1057 = vrot.slane %v29, %v1056
    %v1058 = vsel %vm1038, %v1057, %v942
    %v1059 = vsel %vm1039, %v1057, %v943
    %v1060 = vsel %vm1040, %v1057, %v944
    %v1061 = vsel %vm1041, %v1057, %v945
    %v1062 = vsel %vm1042, %v1057, %v946
    %v1063 = vsel %vm1043, %v1057, %v947
    %v1064 = vsel %vm1044, %v1057, %v948
    %v1065 = vsel %vm1045, %v1057, %v949
    %v1066 = vsel %vm1046, %v1057, %v950
    %v1067 = vsel %vm1047, %v1057, %v951
    %v1068 = vsel %vm1048, %v1057, %v952
    %v1069 = vsel %vm1049, %v1057, %v953
    %v1070 = vsel %vm1050, %v1057, %v954
    %v1071 = vsel %vm1051, %v1057, %v955
    %v1072 = vsel %vm1052, %v1057, %v956
    %v1073 = vsel %vm1053, %v1057, %v957
    %vm1074 = vcmp.eq.s32.totalorder %v12, 9
    %vm1075 = vcmp.eq.s32.totalorder %v13, 9
    %vm1076 = vcmp.eq.s32.totalorder %v14, 9
    %vm1077 = vcmp.eq.s32.totalorder %v15, 9
    %vm1078 = vcmp.eq.s32.totalorder %v16, 9
    %vm1079 = vcmp.eq.s32.totalorder %v17, 9
    %vm1080 = vcmp.eq.s32.totalorder %v18, 9
    %vm1081 = vcmp.eq.s32.totalorder %v19, 9
    %vm1082 = vcmp.eq.s32.totalorder %v20, 9
    %vm1083 = vcmp.eq.s32.totalorder %v21, 9
    %vm1084 = vcmp.eq.s32.totalorder %v22, 9
    %vm1085 = vcmp.eq.s32.totalorder %v23, 9
    %vm1086 = vcmp.eq.s32.totalorder %v24, 9
    %vm1087 = vcmp.eq.s32.totalorder %v25, 9
    %vm1088 = vcmp.eq.s32.totalorder %v26, 9
    %vm1089 = vcmp.eq.s32.totalorder %v27, 9
    %v1090 = vsel %vm1074, 1, 0
    %v1091 = vsel %vm1075, 1, 0
    %v1092 = vsel %vm1076, 1, 0
    %v1093 = vsel %vm1077, 1, 0
    %v1094 = vsel %vm1078, 1, 0
    %v1095 = vsel %vm1079, 1, 0
    %v1096 = vsel %vm1080, 1, 0
    %v1097 = vsel %vm1081, 1, 0
    %v1098 = vsel %vm1082, 1, 0
    %v1099 = vsel %vm1083, 1, 0
    %v1100 = vsel %vm1084, 1, 0
    %v1101 = vsel %vm1085, 1, 0
    %v1102 = vsel %vm1086, 1, 0
    %v1103 = vsel %vm1087, 1, 0
    %v1104 = vsel %vm1088, 1, 0
    %v1105 = vsel %vm1089, 1, 0
    %1106 = vset.pattern.permute.xlu0 0
    %1107 = vperm.xlu0 %1106, %v1090
    %v1108 = vpop.permute.xlu0 %1107
    %1109 = vset.pattern.permute.xlu0 0
    %1110 = vperm.xlu0 %1109, %v1091
    %v1111 = vpop.permute.xlu0 %1110
    %1112 = vset.pattern.permute.xlu0 0
    %1113 = vperm.xlu0 %1112, %v1092
    %v1114 = vpop.permute.xlu0 %1113
    %1115 = vset.pattern.permute.xlu0 0
    %1116 = vperm.xlu0 %1115, %v1093
    %v1117 = vpop.permute.xlu0 %1116
    %1118 = vset.pattern.permute.xlu0 0
    %1119 = vperm.xlu0 %1118, %v1094
    %v1120 = vpop.permute.xlu0 %1119
    %1121 = vset.pattern.permute.xlu0 0
    %1122 = vperm.xlu0 %1121, %v1095
    %v1123 = vpop.permute.xlu0 %1122
    %1124 = vset.pattern.permute.xlu0 0
    %1125 = vperm.xlu0 %1124, %v1096
    %v1126 = vpop.permute.xlu0 %1125
    %1127 = vset.pattern.permute.xlu0 0
    %1128 = vperm.xlu0 %1127, %v1097
    %v1129 = vpop.permute.xlu0 %1128
    %1130 = vset.pattern.permute.xlu0 0
    %1131 = vperm.xlu0 %1130, %v1098
    %v1132 = vpop.permute.xlu0 %1131
    %1133 = vset.pattern.permute.xlu0 0
    %1134 = vperm.xlu0 %1133, %v1099
    %v1135 = vpop.permute.xlu0 %1134
    %1136 = vset.pattern.permute.xlu0 0
    %1137 = vperm.xlu0 %1136, %v1100
    %v1138 = vpop.permute.xlu0 %1137
    %1139 = vset.pattern.permute.xlu0 0
    %1140 = vperm.xlu0 %1139, %v1101
    %v1141 = vpop.permute.xlu0 %1140
    %1142 = vset.pattern.permute.xlu0 0
    %1143 = vperm.xlu0 %1142, %v1102
    %v1144 = vpop.permute.xlu0 %1143
    %1145 = vset.pattern.permute.xlu0 0
    %1146 = vperm.xlu0 %1145, %v1103
    %v1147 = vpop.permute.xlu0 %1146
    %1148 = vset.pattern.permute.xlu0 0
    %1149 = vperm.xlu0 %1148, %v1104
    %v1150 = vpop.permute.xlu0 %1149
    %1151 = vset.pattern.permute.xlu0 0
    %1152 = vperm.xlu0 %1151, %v1105
    %v1153 = vpop.permute.xlu0 %1152
    %vm1154 = vcmp.eq.s32.totalorder %v1108, 1
    %vm1155 = vcmp.eq.s32.totalorder %v1111, 1
    %vm1156 = vcmp.eq.s32.totalorder %v1114, 1
    %vm1157 = vcmp.eq.s32.totalorder %v1117, 1
    %vm1158 = vcmp.eq.s32.totalorder %v1120, 1
    %vm1159 = vcmp.eq.s32.totalorder %v1123, 1
    %vm1160 = vcmp.eq.s32.totalorder %v1126, 1
    %vm1161 = vcmp.eq.s32.totalorder %v1129, 1
    %vm1162 = vcmp.eq.s32.totalorder %v1132, 1
    %vm1163 = vcmp.eq.s32.totalorder %v1135, 1
    %vm1164 = vcmp.eq.s32.totalorder %v1138, 1
    %vm1165 = vcmp.eq.s32.totalorder %v1141, 1
    %vm1166 = vcmp.eq.s32.totalorder %v1144, 1
    %vm1167 = vcmp.eq.s32.totalorder %v1147, 1
    %vm1168 = vcmp.eq.s32.totalorder %v1150, 1
    %vm1169 = vcmp.eq.s32.totalorder %v1153, 1
    %v1170 = vlaneseq
    %v1171 = vshrl.u32 %v1170, 7
    %v1172 = vsub.s32 1, %v1171
    %v1173 = vrot.slane %v29, %v1172
    %v1174 = vsel %vm1154, %v1173, %v1058
    %v1175 = vsel %vm1155, %v1173, %v1059
    %v1176 = vsel %vm1156, %v1173, %v1060
    %v1177 = vsel %vm1157, %v1173, %v1061
    %v1178 = vsel %vm1158, %v1173, %v1062
    %v1179 = vsel %vm1159, %v1173, %v1063
    %v1180 = vsel %vm1160, %v1173, %v1064
    %v1181 = vsel %vm1161, %v1173, %v1065
    %v1182 = vsel %vm1162, %v1173, %v1066
    %v1183 = vsel %vm1163, %v1173, %v1067
    %v1184 = vsel %vm1164, %v1173, %v1068
    %v1185 = vsel %vm1165, %v1173, %v1069
    %v1186 = vsel %vm1166, %v1173, %v1070
    %v1187 = vsel %vm1167, %v1173, %v1071
    %v1188 = vsel %vm1168, %v1173, %v1072
    %v1189 = vsel %vm1169, %v1173, %v1073
    %vm1190 = vcmp.eq.s32.totalorder %v12, 10
    %vm1191 = vcmp.eq.s32.totalorder %v13, 10
    %vm1192 = vcmp.eq.s32.totalorder %v14, 10
    %vm1193 = vcmp.eq.s32.totalorder %v15, 10
    %vm1194 = vcmp.eq.s32.totalorder %v16, 10
    %vm1195 = vcmp.eq.s32.totalorder %v17, 10
    %vm1196 = vcmp.eq.s32.totalorder %v18, 10
    %vm1197 = vcmp.eq.s32.totalorder %v19, 10
    %vm1198 = vcmp.eq.s32.totalorder %v20, 10
    %vm1199 = vcmp.eq.s32.totalorder %v21, 10
    %vm1200 = vcmp.eq.s32.totalorder %v22, 10
    %vm1201 = vcmp.eq.s32.totalorder %v23, 10
    %vm1202 = vcmp.eq.s32.totalorder %v24, 10
    %vm1203 = vcmp.eq.s32.totalorder %v25, 10
    %vm1204 = vcmp.eq.s32.totalorder %v26, 10
    %vm1205 = vcmp.eq.s32.totalorder %v27, 10
    %v1206 = vsel %vm1190, 1, 0
    %v1207 = vsel %vm1191, 1, 0
    %v1208 = vsel %vm1192, 1, 0
    %v1209 = vsel %vm1193, 1, 0
    %v1210 = vsel %vm1194, 1, 0
    %v1211 = vsel %vm1195, 1, 0
    %v1212 = vsel %vm1196, 1, 0
    %v1213 = vsel %vm1197, 1, 0
    %v1214 = vsel %vm1198, 1, 0
    %v1215 = vsel %vm1199, 1, 0
    %v1216 = vsel %vm1200, 1, 0
    %v1217 = vsel %vm1201, 1, 0
    %v1218 = vsel %vm1202, 1, 0
    %v1219 = vsel %vm1203, 1, 0
    %v1220 = vsel %vm1204, 1, 0
    %v1221 = vsel %vm1205, 1, 0
    %1222 = vset.pattern.permute.xlu0 0
    %1223 = vperm.xlu0 %1222, %v1206
    %v1224 = vpop.permute.xlu0 %1223
    %1225 = vset.pattern.permute.xlu0 0
    %1226 = vperm.xlu0 %1225, %v1207
    %v1227 = vpop.permute.xlu0 %1226
    %1228 = vset.pattern.permute.xlu0 0
    %1229 = vperm.xlu0 %1228, %v1208
    %v1230 = vpop.permute.xlu0 %1229
    %1231 = vset.pattern.permute.xlu0 0
    %1232 = vperm.xlu0 %1231, %v1209
    %v1233 = vpop.permute.xlu0 %1232
    %1234 = vset.pattern.permute.xlu0 0
    %1235 = vperm.xlu0 %1234, %v1210
    %v1236 = vpop.permute.xlu0 %1235
    %1237 = vset.pattern.permute.xlu0 0
    %1238 = vperm.xlu0 %1237, %v1211
    %v1239 = vpop.permute.xlu0 %1238
    %1240 = vset.pattern.permute.xlu0 0
    %1241 = vperm.xlu0 %1240, %v1212
    %v1242 = vpop.permute.xlu0 %1241
    %1243 = vset.pattern.permute.xlu0 0
    %1244 = vperm.xlu0 %1243, %v1213
    %v1245 = vpop.permute.xlu0 %1244
    %1246 = vset.pattern.permute.xlu0 0
    %1247 = vperm.xlu0 %1246, %v1214
    %v1248 = vpop.permute.xlu0 %1247
    %1249 = vset.pattern.permute.xlu0 0
    %1250 = vperm.xlu0 %1249, %v1215
    %v1251 = vpop.permute.xlu0 %1250
    %1252 = vset.pattern.permute.xlu0 0
    %1253 = vperm.xlu0 %1252, %v1216
    %v1254 = vpop.permute.xlu0 %1253
    %1255 = vset.pattern.permute.xlu0 0
    %1256 = vperm.xlu0 %1255, %v1217
    %v1257 = vpop.permute.xlu0 %1256
    %1258 = vset.pattern.permute.xlu0 0
    %1259 = vperm.xlu0 %1258, %v1218
    %v1260 = vpop.permute.xlu0 %1259
    %1261 = vset.pattern.permute.xlu0 0
    %1262 = vperm.xlu0 %1261, %v1219
    %v1263 = vpop.permute.xlu0 %1262
    %1264 = vset.pattern.permute.xlu0 0
    %1265 = vperm.xlu0 %1264, %v1220
    %v1266 = vpop.permute.xlu0 %1265
    %1267 = vset.pattern.permute.xlu0 0
    %1268 = vperm.xlu0 %1267, %v1221
    %v1269 = vpop.permute.xlu0 %1268
    %vm1270 = vcmp.eq.s32.totalorder %v1224, 1
    %vm1271 = vcmp.eq.s32.totalorder %v1227, 1
    %vm1272 = vcmp.eq.s32.totalorder %v1230, 1
    %vm1273 = vcmp.eq.s32.totalorder %v1233, 1
    %vm1274 = vcmp.eq.s32.totalorder %v1236, 1
    %vm1275 = vcmp.eq.s32.totalorder %v1239, 1
    %vm1276 = vcmp.eq.s32.totalorder %v1242, 1
    %vm1277 = vcmp.eq.s32.totalorder %v1245, 1
    %vm1278 = vcmp.eq.s32.totalorder %v1248, 1
    %vm1279 = vcmp.eq.s32.totalorder %v1251, 1
    %vm1280 = vcmp.eq.s32.totalorder %v1254, 1
    %vm1281 = vcmp.eq.s32.totalorder %v1257, 1
    %vm1282 = vcmp.eq.s32.totalorder %v1260, 1
    %vm1283 = vcmp.eq.s32.totalorder %v1263, 1
    %vm1284 = vcmp.eq.s32.totalorder %v1266, 1
    %vm1285 = vcmp.eq.s32.totalorder %v1269, 1
    %v1286 = vlaneseq
    %v1287 = vshrl.u32 %v1286, 7
    %v1288 = vsub.s32 2, %v1287
    %v1289 = vrot.slane %v29, %v1288
    %v1290 = vsel %vm1270, %v1289, %v1174
    %v1291 = vsel %vm1271, %v1289, %v1175
    %v1292 = vsel %vm1272, %v1289, %v1176
    %v1293 = vsel %vm1273, %v1289, %v1177
    %v1294 = vsel %vm1274, %v1289, %v1178
    %v1295 = vsel %vm1275, %v1289, %v1179
    %v1296 = vsel %vm1276, %v1289, %v1180
    %v1297 = vsel %vm1277, %v1289, %v1181
    %v1298 = vsel %vm1278, %v1289, %v1182
    %v1299 = vsel %vm1279, %v1289, %v1183
    %v1300 = vsel %vm1280, %v1289, %v1184
    %v1301 = vsel %vm1281, %v1289, %v1185
    %v1302 = vsel %vm1282, %v1289, %v1186
    %v1303 = vsel %vm1283, %v1289, %v1187
    %v1304 = vsel %vm1284, %v1289, %v1188
    %v1305 = vsel %vm1285, %v1289, %v1189
    %vm1306 = vcmp.eq.s32.totalorder %v12, 11
    %vm1307 = vcmp.eq.s32.totalorder %v13, 11
    %vm1308 = vcmp.eq.s32.totalorder %v14, 11
    %vm1309 = vcmp.eq.s32.totalorder %v15, 11
    %vm1310 = vcmp.eq.s32.totalorder %v16, 11
    %vm1311 = vcmp.eq.s32.totalorder %v17, 11
    %vm1312 = vcmp.eq.s32.totalorder %v18, 11
    %vm1313 = vcmp.eq.s32.totalorder %v19, 11
    %vm1314 = vcmp.eq.s32.totalorder %v20, 11
    %vm1315 = vcmp.eq.s32.totalorder %v21, 11
    %vm1316 = vcmp.eq.s32.totalorder %v22, 11
    %vm1317 = vcmp.eq.s32.totalorder %v23, 11
    %vm1318 = vcmp.eq.s32.totalorder %v24, 11
    %vm1319 = vcmp.eq.s32.totalorder %v25, 11
    %vm1320 = vcmp.eq.s32.totalorder %v26, 11
    %vm1321 = vcmp.eq.s32.totalorder %v27, 11
    %v1322 = vsel %vm1306, 1, 0
    %v1323 = vsel %vm1307, 1, 0
    %v1324 = vsel %vm1308, 1, 0
    %v1325 = vsel %vm1309, 1, 0
    %v1326 = vsel %vm1310, 1, 0
    %v1327 = vsel %vm1311, 1, 0
    %v1328 = vsel %vm1312, 1, 0
    %v1329 = vsel %vm1313, 1, 0
    %v1330 = vsel %vm1314, 1, 0
    %v1331 = vsel %vm1315, 1, 0
    %v1332 = vsel %vm1316, 1, 0
    %v1333 = vsel %vm1317, 1, 0
    %v1334 = vsel %vm1318, 1, 0
    %v1335 = vsel %vm1319, 1, 0
    %v1336 = vsel %vm1320, 1, 0
    %v1337 = vsel %vm1321, 1, 0
    %1338 = vset.pattern.permute.xlu0 0
    %1339 = vperm.xlu0 %1338, %v1322
    %v1340 = vpop.permute.xlu0 %1339
    %1341 = vset.pattern.permute.xlu0 0
    %1342 = vperm.xlu0 %1341, %v1323
    %v1343 = vpop.permute.xlu0 %1342
    %1344 = vset.pattern.permute.xlu0 0
    %1345 = vperm.xlu0 %1344, %v1324
    %v1346 = vpop.permute.xlu0 %1345
    %1347 = vset.pattern.permute.xlu0 0
    %1348 = vperm.xlu0 %1347, %v1325
    %v1349 = vpop.permute.xlu0 %1348
    %1350 = vset.pattern.permute.xlu0 0
    %1351 = vperm.xlu0 %1350, %v1326
    %v1352 = vpop.permute.xlu0 %1351
    %1353 = vset.pattern.permute.xlu0 0
    %1354 = vperm.xlu0 %1353, %v1327
    %v1355 = vpop.permute.xlu0 %1354
    %1356 = vset.pattern.permute.xlu0 0
    %1357 = vperm.xlu0 %1356, %v1328
    %v1358 = vpop.permute.xlu0 %1357
    %1359 = vset.pattern.permute.xlu0 0
    %1360 = vperm.xlu0 %1359, %v1329
    %v1361 = vpop.permute.xlu0 %1360
    %1362 = vset.pattern.permute.xlu0 0
    %1363 = vperm.xlu0 %1362, %v1330
    %v1364 = vpop.permute.xlu0 %1363
    %1365 = vset.pattern.permute.xlu0 0
    %1366 = vperm.xlu0 %1365, %v1331
    %v1367 = vpop.permute.xlu0 %1366
    %1368 = vset.pattern.permute.xlu0 0
    %1369 = vperm.xlu0 %1368, %v1332
    %v1370 = vpop.permute.xlu0 %1369
    %1371 = vset.pattern.permute.xlu0 0
    %1372 = vperm.xlu0 %1371, %v1333
    %v1373 = vpop.permute.xlu0 %1372
    %1374 = vset.pattern.permute.xlu0 0
    %1375 = vperm.xlu0 %1374, %v1334
    %v1376 = vpop.permute.xlu0 %1375
    %1377 = vset.pattern.permute.xlu0 0
    %1378 = vperm.xlu0 %1377, %v1335
    %v1379 = vpop.permute.xlu0 %1378
    %1380 = vset.pattern.permute.xlu0 0
    %1381 = vperm.xlu0 %1380, %v1336
    %v1382 = vpop.permute.xlu0 %1381
    %1383 = vset.pattern.permute.xlu0 0
    %1384 = vperm.xlu0 %1383, %v1337
    %v1385 = vpop.permute.xlu0 %1384
    %vm1386 = vcmp.eq.s32.totalorder %v1340, 1
    %vm1387 = vcmp.eq.s32.totalorder %v1343, 1
    %vm1388 = vcmp.eq.s32.totalorder %v1346, 1
    %vm1389 = vcmp.eq.s32.totalorder %v1349, 1
    %vm1390 = vcmp.eq.s32.totalorder %v1352, 1
    %vm1391 = vcmp.eq.s32.totalorder %v1355, 1
    %vm1392 = vcmp.eq.s32.totalorder %v1358, 1
    %vm1393 = vcmp.eq.s32.totalorder %v1361, 1
    %vm1394 = vcmp.eq.s32.totalorder %v1364, 1
    %vm1395 = vcmp.eq.s32.totalorder %v1367, 1
    %vm1396 = vcmp.eq.s32.totalorder %v1370, 1
    %vm1397 = vcmp.eq.s32.totalorder %v1373, 1
    %vm1398 = vcmp.eq.s32.totalorder %v1376, 1
    %vm1399 = vcmp.eq.s32.totalorder %v1379, 1
    %vm1400 = vcmp.eq.s32.totalorder %v1382, 1
    %vm1401 = vcmp.eq.s32.totalorder %v1385, 1
    %v1402 = vlaneseq
    %v1403 = vshrl.u32 %v1402, 7
    %v1404 = vsub.s32 3, %v1403
    %v1405 = vrot.slane %v29, %v1404
    %v1406 = vsel %vm1386, %v1405, %v1290
    %v1407 = vsel %vm1387, %v1405, %v1291
    %v1408 = vsel %vm1388, %v1405, %v1292
    %v1409 = vsel %vm1389, %v1405, %v1293
    %v1410 = vsel %vm1390, %v1405, %v1294
    %v1411 = vsel %vm1391, %v1405, %v1295
    %v1412 = vsel %vm1392, %v1405, %v1296
    %v1413 = vsel %vm1393, %v1405, %v1297
    %v1414 = vsel %vm1394, %v1405, %v1298
    %v1415 = vsel %vm1395, %v1405, %v1299
    %v1416 = vsel %vm1396, %v1405, %v1300
    %v1417 = vsel %vm1397, %v1405, %v1301
    %v1418 = vsel %vm1398, %v1405, %v1302
    %v1419 = vsel %vm1399, %v1405, %v1303
    %v1420 = vsel %vm1400, %v1405, %v1304
    %v1421 = vsel %vm1401, %v1405, %v1305
    %vm1422 = vcmp.eq.s32.totalorder %v12, 12
    %vm1423 = vcmp.eq.s32.totalorder %v13, 12
    %vm1424 = vcmp.eq.s32.totalorder %v14, 12
    %vm1425 = vcmp.eq.s32.totalorder %v15, 12
    %vm1426 = vcmp.eq.s32.totalorder %v16, 12
    %vm1427 = vcmp.eq.s32.totalorder %v17, 12
    %vm1428 = vcmp.eq.s32.totalorder %v18, 12
    %vm1429 = vcmp.eq.s32.totalorder %v19, 12
    %vm1430 = vcmp.eq.s32.totalorder %v20, 12
    %vm1431 = vcmp.eq.s32.totalorder %v21, 12
    %vm1432 = vcmp.eq.s32.totalorder %v22, 12
    %vm1433 = vcmp.eq.s32.totalorder %v23, 12
    %vm1434 = vcmp.eq.s32.totalorder %v24, 12
    %vm1435 = vcmp.eq.s32.totalorder %v25, 12
    %vm1436 = vcmp.eq.s32.totalorder %v26, 12
    %vm1437 = vcmp.eq.s32.totalorder %v27, 12
    %v1438 = vsel %vm1422, 1, 0
    %v1439 = vsel %vm1423, 1, 0
    %v1440 = vsel %vm1424, 1, 0
    %v1441 = vsel %vm1425, 1, 0
    %v1442 = vsel %vm1426, 1, 0
    %v1443 = vsel %vm1427, 1, 0
    %v1444 = vsel %vm1428, 1, 0
    %v1445 = vsel %vm1429, 1, 0
    %v1446 = vsel %vm1430, 1, 0
    %v1447 = vsel %vm1431, 1, 0
    %v1448 = vsel %vm1432, 1, 0
    %v1449 = vsel %vm1433, 1, 0
    %v1450 = vsel %vm1434, 1, 0
    %v1451 = vsel %vm1435, 1, 0
    %v1452 = vsel %vm1436, 1, 0
    %v1453 = vsel %vm1437, 1, 0
    %1454 = vset.pattern.permute.xlu0 0
    %1455 = vperm.xlu0 %1454, %v1438
    %v1456 = vpop.permute.xlu0 %1455
    %1457 = vset.pattern.permute.xlu0 0
    %1458 = vperm.xlu0 %1457, %v1439
    %v1459 = vpop.permute.xlu0 %1458
    %1460 = vset.pattern.permute.xlu0 0
    %1461 = vperm.xlu0 %1460, %v1440
    %v1462 = vpop.permute.xlu0 %1461
    %1463 = vset.pattern.permute.xlu0 0
    %1464 = vperm.xlu0 %1463, %v1441
    %v1465 = vpop.permute.xlu0 %1464
    %1466 = vset.pattern.permute.xlu0 0
    %1467 = vperm.xlu0 %1466, %v1442
    %v1468 = vpop.permute.xlu0 %1467
    %1469 = vset.pattern.permute.xlu0 0
    %1470 = vperm.xlu0 %1469, %v1443
    %v1471 = vpop.permute.xlu0 %1470
    %1472 = vset.pattern.permute.xlu0 0
    %1473 = vperm.xlu0 %1472, %v1444
    %v1474 = vpop.permute.xlu0 %1473
    %1475 = vset.pattern.permute.xlu0 0
    %1476 = vperm.xlu0 %1475, %v1445
    %v1477 = vpop.permute.xlu0 %1476
    %1478 = vset.pattern.permute.xlu0 0
    %1479 = vperm.xlu0 %1478, %v1446
    %v1480 = vpop.permute.xlu0 %1479
    %1481 = vset.pattern.permute.xlu0 0
    %1482 = vperm.xlu0 %1481, %v1447
    %v1483 = vpop.permute.xlu0 %1482
    %1484 = vset.pattern.permute.xlu0 0
    %1485 = vperm.xlu0 %1484, %v1448
    %v1486 = vpop.permute.xlu0 %1485
    %1487 = vset.pattern.permute.xlu0 0
    %1488 = vperm.xlu0 %1487, %v1449
    %v1489 = vpop.permute.xlu0 %1488
    %1490 = vset.pattern.permute.xlu0 0
    %1491 = vperm.xlu0 %1490, %v1450
    %v1492 = vpop.permute.xlu0 %1491
    %1493 = vset.pattern.permute.xlu0 0
    %1494 = vperm.xlu0 %1493, %v1451
    %v1495 = vpop.permute.xlu0 %1494
    %1496 = vset.pattern.permute.xlu0 0
    %1497 = vperm.xlu0 %1496, %v1452
    %v1498 = vpop.permute.xlu0 %1497
    %1499 = vset.pattern.permute.xlu0 0
    %1500 = vperm.xlu0 %1499, %v1453
    %v1501 = vpop.permute.xlu0 %1500
    %vm1502 = vcmp.eq.s32.totalorder %v1456, 1
    %vm1503 = vcmp.eq.s32.totalorder %v1459, 1
    %vm1504 = vcmp.eq.s32.totalorder %v1462, 1
    %vm1505 = vcmp.eq.s32.totalorder %v1465, 1
    %vm1506 = vcmp.eq.s32.totalorder %v1468, 1
    %vm1507 = vcmp.eq.s32.totalorder %v1471, 1
    %vm1508 = vcmp.eq.s32.totalorder %v1474, 1
    %vm1509 = vcmp.eq.s32.totalorder %v1477, 1
    %vm1510 = vcmp.eq.s32.totalorder %v1480, 1
    %vm1511 = vcmp.eq.s32.totalorder %v1483, 1
    %vm1512 = vcmp.eq.s32.totalorder %v1486, 1
    %vm1513 = vcmp.eq.s32.totalorder %v1489, 1
    %vm1514 = vcmp.eq.s32.totalorder %v1492, 1
    %vm1515 = vcmp.eq.s32.totalorder %v1495, 1
    %vm1516 = vcmp.eq.s32.totalorder %v1498, 1
    %vm1517 = vcmp.eq.s32.totalorder %v1501, 1
    %v1518 = vlaneseq
    %v1519 = vshrl.u32 %v1518, 7
    %v1520 = vsub.s32 4, %v1519
    %v1521 = vrot.slane %v29, %v1520
    %v1522 = vsel %vm1502, %v1521, %v1406
    %v1523 = vsel %vm1503, %v1521, %v1407
    %v1524 = vsel %vm1504, %v1521, %v1408
    %v1525 = vsel %vm1505, %v1521, %v1409
    %v1526 = vsel %vm1506, %v1521, %v1410
    %v1527 = vsel %vm1507, %v1521, %v1411
    %v1528 = vsel %vm1508, %v1521, %v1412
    %v1529 = vsel %vm1509, %v1521, %v1413
    %v1530 = vsel %vm1510, %v1521, %v1414
    %v1531 = vsel %vm1511, %v1521, %v1415
    %v1532 = vsel %vm1512, %v1521, %v1416
    %v1533 = vsel %vm1513, %v1521, %v1417
    %v1534 = vsel %vm1514, %v1521, %v1418
    %v1535 = vsel %vm1515, %v1521, %v1419
    %v1536 = vsel %vm1516, %v1521, %v1420
    %v1537 = vsel %vm1517, %v1521, %v1421
    %vm1538 = vcmask 261120
    %1539 = vst.msk [vmem:[#allocation2] sm:$0xff] %vm1538, %v1522
    %1540 = vst.msk [vmem:[#allocation2 + $0x8] sm:$0xff] %vm1538, %v1523
    %1541 = vst.msk [vmem:[#allocation2 + $0x10] sm:$0xff] %vm1538, %v1524
    %1542 = vst.msk [vmem:[#allocation2 + $0x18] sm:$0xff] %vm1538, %v1525
    %1543 = vst.msk [vmem:[#allocation2 + $0x20] sm:$0xff] %vm1538, %v1526
    %1544 = vst.msk [vmem:[#allocation2 + $0x28] sm:$0xff] %vm1538, %v1527
    %1545 = vst.msk [vmem:[#allocation2 + $0x30] sm:$0xff] %vm1538, %v1528
    %1546 = vst.msk [vmem:[#allocation2 + $0x38] sm:$0xff] %vm1538, %v1529
    %1547 = vst.msk [vmem:[#allocation2 + $0x40] sm:$0xff] %vm1538, %v1530
    %1548 = vst.msk [vmem:[#allocation2 + $0x48] sm:$0xff] %vm1538, %v1531
    %1549 = vst.msk [vmem:[#allocation2 + $0x50] sm:$0xff] %vm1538, %v1532
    %1550 = vst.msk [vmem:[#allocation2 + $0x58] sm:$0xff] %vm1538, %v1533
    %1551 = vst.msk [vmem:[#allocation2 + $0x60] sm:$0xff] %vm1538, %v1534
    %1552 = vst.msk [vmem:[#allocation2 + $0x68] sm:$0xff] %vm1538, %v1535
    %1553 = vst.msk [vmem:[#allocation2 + $0x70] sm:$0xff] %vm1538, %v1536
    %1554 = vst.msk [vmem:[#allocation2 + $0x78] sm:$0xff] %vm1538, %v1537
    // Predicated region
    $region10: #{_piece_embedder_impl.1} parent=1 // pred_check
      _
    $region11: #{_piece_embedder_impl.1} parent=1 // pred_check_branch
      %1556 = sbr.rel (0) target = $region13
    $region12: #{_piece_embedder_impl.1} parent=1 // pred_region
      %s1558 = ssub.s32 2048, 2048
      %1559 = vsyncadd [#allocation3], %s1558
      %s1560 = sshll.u32 [#allocation2], 4
      %s1561 = int_to_ptr.vmem [resolvable:$true] %s1560
      %1566 = dma.vmem_to_hbm [thread:$0]  %s1561, 2048, %s2, [#allocation3], 128, 128, 8
    $region13: #{_piece_embedder_impl.1} parent=1 // pred_fallthru
      _
    // Predicated region
    $region14: #{_piece_embedder_impl.1} parent=1 // pred_check
      _
    $region15: #{_piece_embedder_impl.1} parent=1 // pred_check_branch
      %1568 = sbr.rel (0) target = $region17
    $region16: #{_piece_embedder_impl.1} parent=1 // pred_region
      %1569 = dma.done [#allocation3], 2048
    $region17: #{_piece_embedder_impl.1} parent=1 // pred_fallthru
      _
    %1570 = vsyncpa [#allocation3], 1

</llo_original>
